<compile_context>
chip_gen: v7x
topology: tpu7x:2x2x1
jax: 0.10.0
libtpu: 0.0.40
codegen_flags: <defaults>
</compile_context>

<pallas_src>
import functools

import jax
import jax.numpy as jnp
from jax import lax
from jax.experimental import pallas as pl
from jax.experimental.pallas import tpu as pltpu

_EPS = 1e-5


def _round_up(x, m):
    return ((x + m - 1) // m) * m


def _drtdnn_fused_kernel(*refs, layer_cfgs):
    """refs = (re_ref, im_ref, [gamma, beta, w, b] * L, o_ref, xn_scr, acc_scr).

    re/im     : (F, TN)       VMEM — one batch's frame tile, rows = freq bins, lanes = frames
    gamma/beta: (Cin*S, 1)    VMEM f32 — LayerNorm affine, channel-major rows, lane-broadcast
    w         : (K*Cin*Cout,) SMEM f32 — TD-conv weights, index (t*Cin + ci)*Cout + co
    b         : (Cout,)       SMEM f32
    o_ref     : (CoutL*SL, TN) VMEM f32
    xn_scr    : (>=max Cin*S, TN) VMEM f32 scratch — normalized features (tap source)
    acc_scr   : (>=max conv_out, TN) VMEM f32 scratch — pre-pool conv output
    """
    n_layers = len(layer_cfgs)
    re_ref, im_ref = refs[0], refs[1]
    prefs = refs[2:2 + 4 * n_layers]
    o_ref = refs[2 + 4 * n_layers]
    xn_scr = refs[3 + 4 * n_layers]
    acc_scr = refs[4 + 4 * n_layers]

    F = re_ref.shape[0]
    # channel-major feature rows for layer 0: rows [0, F) = real, [F, 2F) = imag
    parts = [(re_ref[...].astype(jnp.float32), 0),
             (im_ref[...].astype(jnp.float32), F)]

    for li, (S, Cin, Cout, K, stride, pool) in enumerate(layer_cfgs):
        g_ref, be_ref, w_ref, b_ref = prefs[4 * li: 4 * li + 4]
        n_feat = Cin * S
        inv_n = 1.0 / n_feat

        # --- single-pass LayerNorm over the whole (S, Cin) plane, per frame (lane) ---
        s1 = None
        s2 = None
        for part, _ in parts:
            ps1 = jnp.sum(part, axis=0, keepdims=True)           # (1, TN)
            ps2 = jnp.sum(part * part, axis=0, keepdims=True)    # (1, TN)
            s1 = ps1 if s1 is None else s1 + ps1
            s2 = ps2 if s2 is None else s2 + ps2
        mean = s1 * inv_n
        var = jnp.maximum(s2 * inv_n - mean * mean, 0.0)
        rstd = lax.rsqrt(var + _EPS)

        # normalize + affine; store channel-major (row = ci*S + s) into scratch
        for part, off in parts:
            rows = part.shape[0]
            g = g_ref[pl.ds(off, rows), :]       # (rows, 1) — lane broadcast
            be = be_ref[pl.ds(off, rows), :]
            xn_scr[pl.ds(off, rows), :] = (part - mean) * rstd * g + be

        conv_out = (S - K) // stride + 1
        out_s = conv_out // pool

        # --- TD conv: taps-outer scalar*slab FMAs on the VPU ---
        # tap(t, ci)[j, :] = xn[ci*S + j*stride + t, :]
        accs = [None] * Cout
        for t in range(K):
            for ci in range(Cin):
                base = ci * S + t
                if stride == 1:
                    tap = xn_scr[pl.ds(base, conv_out), :]
                else:
                    tap = xn_scr[pl.ds(base, conv_out, stride), :]
                ti = t * Cin + ci
                for co in range(Cout):
                    term = w_ref[ti * Cout + co] * tap
                    accs[co] = term if accs[co] is None else accs[co] + term

        # --- bias + ReLU + MaxPool (strided full-slab vmax), per output channel ---
        last_layer = li == n_layers - 1
        new_parts = []
        for co in range(Cout):
            acc = jnp.maximum(accs[co] + b_ref[co], 0.0)          # (conv_out, TN)
            if pool == 1:
                slab = acc
            else:
                acc_scr[pl.ds(0, conv_out), :] = acc
                slab = acc_scr[pl.ds(0, out_s, pool), :]
                for pi in range(1, pool):
                    slab = jnp.maximum(slab, acc_scr[pl.ds(pi, out_s, pool), :])
            off = co * out_s                                      # channel-major rows
            if last_layer:
                o_ref[pl.ds(off, out_s), :] = slab.astype(o_ref.dtype)
            else:
                new_parts.append((slab, off))
        parts = new_parts


def drtdnn_forward(x_complex, params, *, tile_n=4096, stage_dtype=jnp.float32):
    """x_complex: (B, F, T) complex; returns (B, out_size, T) f32."""
    B, F, T = x_complex.shape

    # no transpose/reshape HBM pass: real/imag stay (B, F, T); the kernel builds
    # the channel-major view.  Optionally stage in bf16 to halve input HBM bytes.
    re = jnp.real(x_complex).astype(stage_dtype)
    im = jnp.imag(x_complex).astype(stage_dtype)

    # lane tile: multiple of 128; keep >=2 total grid steps for v7x (2 TCs/chip)
    t_full = _round_up(T, 128)
    tn = min(_round_up(min(tile_n, T), 128), t_full)
    if B == 1 and t_full >= 256:
        tn = min(tn, _round_up(t_full // 2, 128))
    t_pad = _round_up(T, tn)
    if t_pad != T:
        pad = ((0, 0), (0, 0), (0, t_pad - T))
        re = jnp.pad(re, pad)
        im = jnp.pad(im, pad)

    layer_cfgs = tuple(
        (p["S"], p["Cin"], p["Cout"], p["K"], p["stride"], p["pool"]) for p in params)
    last = params[-1]
    out_size = ((last["S"] - last["K"]) // last["stride"] + 1) // last["pool"]
    cout = last["Cout"]
    feat_out = cout * out_size

    xn_rows = _round_up(max(p["Cin"] * p["S"] for p in params), 8)
    acc_rows = _round_up(max((p["S"] - p["K"]) // p["stride"] + 1 for p in params), 8)

    smem = pl.BlockSpec(memory_space=pltpu.MemorySpace.SMEM)
    x_spec = pl.BlockSpec((pl.Squeezed(), F, tn), lambda b, i: (b, 0, i))
    in_specs = [x_spec, x_spec]
    args = [re, im]
    for p in params:
        fc = p["Cin"] * p["S"]
        in_specs += [pl.BlockSpec((fc, 1), lambda b, i: (0, 0)),   # gamma (resident)
                     pl.BlockSpec((fc, 1), lambda b, i: (0, 0)),   # beta  (resident)
                     smem,                                         # w scalars
                     smem]                                         # b scalars
        args += [p["gamma"], p["beta"], p["w"], p["b"]]

    kernel = functools.partial(_drtdnn_fused_kernel, layer_cfgs=layer_cfgs)
    y = pl.pallas_call(
        kernel,
        grid=(B, t_pad // tn),
        in_specs=in_specs,
        out_specs=pl.BlockSpec((pl.Squeezed(), feat_out, tn), lambda b, i: (b, 0, i)),
        out_shape=jax.ShapeDtypeStruct((B, feat_out, t_pad), jnp.float32),
        scratch_shapes=[pltpu.VMEM((xn_rows, tn), jnp.float32),
                        pltpu.VMEM((acc_rows, tn), jnp.float32)],
        compiler_params=pltpu.CompilerParams(
            dimension_semantics=("parallel", "parallel"),
            # 48 MiB: enough for 4-8K lane tiles, still safe on v7x's 64 MiB VMEM
            vmem_limit_bytes=48 * 1024 * 1024),
    )(*args)

    # final Cout == 1, so rows are exactly the out_size axis -> (B, out_size, T)
    return y[:, :, :T]


def init_drtdnn_params(key, *, win_size, kernel_size, channels, strides, pooling):
    """Deterministic synthetic parameter init matching the module's shapes.

    gamma/beta are stored channel-major (row = ci*S + s); porting real torch
    LayerNorm([S, Cin]) weights requires a transpose before flattening.
    """
    L = len(kernel_size)
    assert L >= 1 and len(channels) == L - 1
    assert len(strides) == L and len(pooling) == L
    channels = list(channels) + [1]
    size = win_size + 1
    chin = 2
    params, sizes = [], [(size, chin)]
    for chout, k, s, p in zip(channels, kernel_size, strides, pooling):
        key, wk, bk = jax.random.split(key, 3)
        gamma = jnp.ones((chin * size, 1), jnp.float32)
        beta = jnp.zeros((chin * size, 1), jnp.float32)
        fan_in = k * chin
        w = jax.random.normal(wk, (k, chin, chout), jnp.float32) / jnp.sqrt(fan_in)
        b = 0.01 * jax.random.normal(bk, (chout,), jnp.float32)
        conv_out = (size - k) // s + 1
        assert conv_out % p == 0
        params.append(dict(gamma=gamma, beta=beta, w=w.reshape(-1), b=b,
                           S=size, Cin=chin, Cout=chout, K=k, stride=s, pool=p))
        size = conv_out // p
        chin = chout
        sizes.append((size, chin))
    return params, sizes


def drtdnn_reference(x_complex, params):
    """Pure-JAX reference matching the fused kernel (frames-first layout)."""
    B, F, T = x_complex.shape
    xr = jnp.stack([jnp.real(x_complex), jnp.imag(x_complex)], axis=-1)  # (B,F,T,2)
    xr = jnp.swapaxes(xr, 1, 2).astype(jnp.float32)                      # (B,T,F,2)
    cur = xr.reshape(B * T, F, 2)
    for p in params:
        S, Cin, Cout = p["S"], p["Cin"], p["Cout"]
        K, stride, pool = p["K"], p["stride"], p["pool"]
        mean = jnp.mean(cur, axis=(1, 2), keepdims=True)
        var = jnp.mean((cur - mean) ** 2, axis=(1, 2), keepdims=True)
        xn = (cur - mean) / jnp.sqrt(var + _EPS)
        g = p["gamma"].reshape(Cin, S).T
        be = p["beta"].reshape(Cin, S).T
        xn = xn * g[None] + be[None]
        conv_out = (S - K) // stride + 1
        taps = [xn[:, t: t + stride * (conv_out - 1) + 1: stride, :] for t in range(K)]
        unf = jnp.concatenate(taps, axis=-1)                  # (N, conv_out, K*Cin)
        W = p["w"].reshape(K * Cin, Cout)
        y = jnp.einsum("njf,fo->njo", unf, W) + p["b"]
        y = jnp.maximum(y, 0.0)
        out_s = conv_out // pool
        y = y.reshape(-1, out_s, pool, Cout).max(axis=2)
        cur = y
    out_s, cout = cur.shape[1], cur.shape[2]
    out = cur.reshape(B, T, out_s, cout)
    out = jnp.swapaxes(out, 1, 2)                             # (B, out_s, T, cout)
    return out[..., 0]


if __name__ == "__main__":
    # Small, self-consistent config: win_size=17 -> size 18,
    # L=2, kernels (3,3), channels (4,), strides (1,1), pooling (2,1)
    # sizes: (18,2) -> (8,4) -> (6,1)
    # TODO(synk): TDLayer/GlobalConfig not in the provided source; TDLayer assumed
    # to be an un-padded 1-D time-delay conv (see module docstring at top).
    win_size = 17
    kernel_size = (3, 3)
    channels = (4,)
    strides = (1, 1)
    pooling = (2, 1)

    key = jax.random.PRNGKey(0)
    pkey, rkey, ikey = jax.random.split(key, 3)
    params, sizes = init_drtdnn_params(
        pkey, win_size=win_size, kernel_size=kernel_size,
        channels=channels, strides=strides, pooling=pooling)

    B, T = 2, 8
    F = win_size + 1
    x = (jax.random.normal(rkey, (B, F, T), jnp.float32)
         + 1j * jax.random.normal(ikey, (B, F, T), jnp.float32)).astype(jnp.complex64)

    out = jax.block_until_ready(drtdnn_forward(x, params))
    ref = jax.block_until_ready(drtdnn_reference(x, params))

    expected = (B, sizes[-1][0], T)
    assert out.shape == expected, (out.shape, expected)
    assert bool(jnp.all(jnp.isfinite(out)))
    assert bool(jnp.allclose(out, ref, atol=2e-4, rtol=2e-4)), \
        float(jnp.max(jnp.abs(out - ref)))
    print("KERNEL_OK")
</pallas_src>

<mosaic_0001>
module attributes {stable_mosaic.version = 11 : i64} {
  func.func @_drtdnn_fused_kernel(%arg0: i32, %arg1: i32, %arg2: memref<1x18x128xf32, #tpu.memory_space<vmem>>, %arg3: memref<1x18x128xf32, #tpu.memory_space<vmem>>, %arg4: memref<36x1xf32, #tpu.memory_space<vmem>>, %arg5: memref<36x1xf32, #tpu.memory_space<vmem>>, %arg6: memref<24xf32, #tpu.memory_space<smem>>, %arg7: memref<4xf32, #tpu.memory_space<smem>>, %arg8: memref<32x1xf32, #tpu.memory_space<vmem>>, %arg9: memref<32x1xf32, #tpu.memory_space<vmem>>, %arg10: memref<12xf32, #tpu.memory_space<smem>>, %arg11: memref<1xf32, #tpu.memory_space<smem>>, %arg12: memref<1x6x128xf32, #tpu.memory_space<vmem>>, %arg13: memref<40x128xf32, #tpu.memory_space<vmem>>, %arg14: memref<16x128xf32, #tpu.memory_space<vmem>>) attributes {dimension_semantics = [#tpu.dimension_semantics<parallel>, #tpu.dimension_semantics<parallel>], iteration_bounds = array<i64: 2, 1>, scalar_prefetch = 0 : i64, scratch_operands = 2 : i64, tpu.core_type = #tpu.core_type<tc>, window_params = [{transform_indices = @transform_0, window_bounds = array<i64: 1, 18, 128>}, {transform_indices = @transform_1, window_bounds = array<i64: 1, 18, 128>}, {pipeline_mode = #tpu.pipeline_mode<synchronous>, transform_indices = @transform_2, window_bounds = array<i64: 36, 1>}, {pipeline_mode = #tpu.pipeline_mode<synchronous>, transform_indices = @transform_3, window_bounds = array<i64: 36, 1>}, {transform_indices = @transform_4, window_bounds = array<i64: 24>}, {transform_indices = @transform_5, window_bounds = array<i64: 4>}, {pipeline_mode = #tpu.pipeline_mode<synchronous>, transform_indices = @transform_6, window_bounds = array<i64: 32, 1>}, {pipeline_mode = #tpu.pipeline_mode<synchronous>, transform_indices = @transform_7, window_bounds = array<i64: 32, 1>}, {transform_indices = @transform_8, window_bounds = array<i64: 12>}, {transform_indices = @transform_9, window_bounds = array<i64: 1>}, {transform_indices = @transform_10, window_bounds = array<i64: 1, 6, 128>}]} {
    %c0 = arith.constant 0 : index
    %c0_0 = arith.constant 0 : index
    %c0_1 = arith.constant 0 : index
    %0 = vector.load %arg2[%c0, %c0_0, %c0_1] : memref<1x18x128xf32, #tpu.memory_space<vmem>>, vector<1x18x128xf32>
    %1 = vector.shape_cast %0 : vector<1x18x128xf32> to vector<18x128xf32>
    %c0_2 = arith.constant 0 : index
    %c0_3 = arith.constant 0 : index
    %c0_4 = arith.constant 0 : index
    %2 = vector.load %arg3[%c0_2, %c0_3, %c0_4] : memref<1x18x128xf32, #tpu.memory_space<vmem>>, vector<1x18x128xf32>
    %3 = vector.shape_cast %2 : vector<1x18x128xf32> to vector<18x128xf32>
    %cst = arith.constant dense<0.000000e+00> : vector<128xf32>
    %4 = vector.multi_reduction <add>, %1, %cst [0] : vector<18x128xf32> to vector<128xf32>
    %5 = vector.shape_cast %4 : vector<128xf32> to vector<1x128xf32>
    %6 = arith.mulf %1, %1 : vector<18x128xf32>
    %cst_5 = arith.constant dense<0.000000e+00> : vector<128xf32>
    %7 = vector.multi_reduction <add>, %6, %cst_5 [0] : vector<18x128xf32> to vector<128xf32>
    %8 = vector.shape_cast %7 : vector<128xf32> to vector<1x128xf32>
    %cst_6 = arith.constant dense<0.000000e+00> : vector<128xf32>
    %9 = vector.multi_reduction <add>, %3, %cst_6 [0] : vector<18x128xf32> to vector<128xf32>
    %10 = vector.shape_cast %9 : vector<128xf32> to vector<1x128xf32>
    %11 = arith.mulf %3, %3 : vector<18x128xf32>
    %cst_7 = arith.constant dense<0.000000e+00> : vector<128xf32>
    %12 = vector.multi_reduction <add>, %11, %cst_7 [0] : vector<18x128xf32> to vector<128xf32>
    %13 = vector.shape_cast %12 : vector<128xf32> to vector<1x128xf32>
    %14 = arith.addf %5, %10 : vector<1x128xf32>
    %15 = arith.addf %8, %13 : vector<1x128xf32>
    %cst_8 = arith.constant 0.027777778 : f32
    %16 = vector.broadcast %cst_8 : f32 to vector<1x128xf32>
    %17 = arith.mulf %14, %16 : vector<1x128xf32>
    %cst_9 = arith.constant 0.027777778 : f32
    %18 = vector.broadcast %cst_9 : f32 to vector<1x128xf32>
    %19 = arith.mulf %15, %18 : vector<1x128xf32>
    %20 = arith.mulf %17, %17 : vector<1x128xf32>
    %21 = arith.subf %19, %20 : vector<1x128xf32>
    %cst_10 = arith.constant 0.000000e+00 : f32
    %22 = vector.broadcast %cst_10 : f32 to vector<1x128xf32>
    %23 = arith.maximumf %21, %22 : vector<1x128xf32>
    %cst_11 = arith.constant 9.99999974E-6 : f32
    %24 = vector.broadcast %cst_11 : f32 to vector<1x128xf32>
    %25 = arith.addf %23, %24 : vector<1x128xf32>
    %26 = math.rsqrt %25 : vector<1x128xf32>
    %c0_12 = arith.constant 0 : index
    %c0_13 = arith.constant 0 : index
    %27 = vector.load %arg4[%c0_12, %c0_13] : memref<36x1xf32, #tpu.memory_space<vmem>>, vector<18x1xf32>
    %c0_14 = arith.constant 0 : index
    %c0_15 = arith.constant 0 : index
    %28 = vector.load %arg5[%c0_14, %c0_15] : memref<36x1xf32, #tpu.memory_space<vmem>>, vector<18x1xf32>
    %29 = vector.broadcast %17 : vector<1x128xf32> to vector<18x128xf32>
    %30 = arith.subf %1, %29 : vector<18x128xf32>
    %31 = vector.broadcast %26 : vector<1x128xf32> to vector<18x128xf32>
    %32 = arith.mulf %30, %31 : vector<18x128xf32>
    %33 = vector.broadcast %27 : vector<18x1xf32> to vector<18x128xf32>
    %34 = arith.mulf %32, %33 : vector<18x128xf32>
    %35 = vector.broadcast %28 : vector<18x1xf32> to vector<18x128xf32>
    %36 = arith.addf %34, %35 : vector<18x128xf32>
    %c0_16 = arith.constant 0 : index
    %c0_17 = arith.constant 0 : index
    %37 = vector.load %arg13[%c0_16, %c0_17] : memref<40x128xf32, #tpu.memory_space<vmem>>, vector<18x128xf32>
    tpu.vector_store %arg13[%c0_16, %c0_17], %36 {strides = array<i32>} : memref<40x128xf32, #tpu.memory_space<vmem>>, vector<18x128xf32>,
    %c18 = arith.constant 18 : index
    %c0_18 = arith.constant 0 : index
    %38 = vector.load %arg4[%c18, %c0_18] : memref<36x1xf32, #tpu.memory_space<vmem>>, vector<18x1xf32>
    %c18_19 = arith.constant 18 : index
    %c0_20 = arith.constant 0 : index
    %39 = vector.load %arg5[%c18_19, %c0_20] : memref<36x1xf32, #tpu.memory_space<vmem>>, vector<18x1xf32>
    %40 = vector.broadcast %17 : vector<1x128xf32> to vector<18x128xf32>
    %41 = arith.subf %3, %40 : vector<18x128xf32>
    %42 = vector.broadcast %26 : vector<1x128xf32> to vector<18x128xf32>
    %43 = arith.mulf %41, %42 : vector<18x128xf32>
    %44 = vector.broadcast %38 : vector<18x1xf32> to vector<18x128xf32>
    %45 = arith.mulf %43, %44 : vector<18x128xf32>
    %46 = vector.broadcast %39 : vector<18x1xf32> to vector<18x128xf32>
    %47 = arith.addf %45, %46 : vector<18x128xf32>
    %c18_21 = arith.constant 18 : index
    %c0_22 = arith.constant 0 : index
    %48 = vector.load %arg13[%c18_21, %c0_22] : memref<40x128xf32, #tpu.memory_space<vmem>>, vector<18x128xf32>
    tpu.vector_store %arg13[%c18_21, %c0_22], %47 {strides = array<i32>} : memref<40x128xf32, #tpu.memory_space<vmem>>, vector<18x128xf32>,
    %c0_23 = arith.constant 0 : index
    %c0_24 = arith.constant 0 : index
    %49 = vector.load %arg13[%c0_23, %c0_24] : memref<40x128xf32, #tpu.memory_space<vmem>>, vector<16x128xf32>
    %c0_25 = arith.constant 0 : index
    %50 = memref.load %arg6[%c0_25] : memref<24xf32, #tpu.memory_space<smem>>
    %51 = vector.broadcast %50 : f32 to vector<16x128xf32>
    %52 = arith.mulf %51, %49 : vector<16x128xf32>
    %c1 = arith.constant 1 : index
    %53 = memref.load %arg6[%c1] : memref<24xf32, #tpu.memory_space<smem>>
    %54 = vector.broadcast %53 : f32 to vector<16x128xf32>
    %55 = arith.mulf %54, %49 : vector<16x128xf32>
    %c2 = arith.constant 2 : index
    %56 = memref.load %arg6[%c2] : memref<24xf32, #tpu.memory_space<smem>>
    %57 = vector.broadcast %56 : f32 to vector<16x128xf32>
    %58 = arith.mulf %57, %49 : vector<16x128xf32>
    %c3 = arith.constant 3 : index
    %59 = memref.load %arg6[%c3] : memref<24xf32, #tpu.memory_space<smem>>
    %60 = vector.broadcast %59 : f32 to vector<16x128xf32>
    %61 = arith.mulf %60, %49 : vector<16x128xf32>
    %c18_26 = arith.constant 18 : index
    %c0_27 = arith.constant 0 : index
    %62 = vector.load %arg13[%c18_26, %c0_27] : memref<40x128xf32, #tpu.memory_space<vmem>>, vector<16x128xf32>
    %c4 = arith.constant 4 : index
    %63 = memref.load %arg6[%c4] : memref<24xf32, #tpu.memory_space<smem>>
    %64 = vector.broadcast %63 : f32 to vector<16x128xf32>
    %65 = arith.mulf %64, %62 : vector<16x128xf32>
    %66 = arith.addf %52, %65 : vector<16x128xf32>
    %c5 = arith.constant 5 : index
    %67 = memref.load %arg6[%c5] : memref<24xf32, #tpu.memory_space<smem>>
    %68 = vector.broadcast %67 : f32 to vector<16x128xf32>
    %69 = arith.mulf %68, %62 : vector<16x128xf32>
    %70 = arith.addf %55, %69 : vector<16x128xf32>
    %c6 = arith.constant 6 : index
    %71 = memref.load %arg6[%c6] : memref<24xf32, #tpu.memory_space<smem>>
    %72 = vector.broadcast %71 : f32 to vector<16x128xf32>
    %73 = arith.mulf %72, %62 : vector<16x128xf32>
    %74 = arith.addf %58, %73 : vector<16x128xf32>
    %c7 = arith.constant 7 : index
    %75 = memref.load %arg6[%c7] : memref<24xf32, #tpu.memory_space<smem>>
    %76 = vector.broadcast %75 : f32 to vector<16x128xf32>
    %77 = arith.mulf %76, %62 : vector<16x128xf32>
    %78 = arith.addf %61, %77 : vector<16x128xf32>
    %c1_28 = arith.constant 1 : index
    %c0_29 = arith.constant 0 : index
    %79 = vector.load %arg13[%c1_28, %c0_29] : memref<40x128xf32, #tpu.memory_space<vmem>>, vector<16x128xf32>
    %c8 = arith.constant 8 : index
    %80 = memref.load %arg6[%c8] : memref<24xf32, #tpu.memory_space<smem>>
    %81 = vector.broadcast %80 : f32 to vector<16x128xf32>
    %82 = arith.mulf %81, %79 : vector<16x128xf32>
    %83 = arith.addf %66, %82 : vector<16x128xf32>
    %c9 = arith.constant 9 : index
    %84 = memref.load %arg6[%c9] : memref<24xf32, #tpu.memory_space<smem>>
    %85 = vector.broadcast %84 : f32 to vector<16x128xf32>
    %86 = arith.mulf %85, %79 : vector<16x128xf32>
    %87 = arith.addf %70, %86 : vector<16x128xf32>
    %c10 = arith.constant 10 : index
    %88 = memref.load %arg6[%c10] : memref<24xf32, #tpu.memory_space<smem>>
    %89 = vector.broadcast %88 : f32 to vector<16x128xf32>
    %90 = arith.mulf %89, %79 : vector<16x128xf32>
    %91 = arith.addf %74, %90 : vector<16x128xf32>
    %c11 = arith.constant 11 : index
    %92 = memref.load %arg6[%c11] : memref<24xf32, #tpu.memory_space<smem>>
    %93 = vector.broadcast %92 : f32 to vector<16x128xf32>
    %94 = arith.mulf %93, %79 : vector<16x128xf32>
    %95 = arith.addf %78, %94 : vector<16x128xf32>
    %c19 = arith.constant 19 : index
    %c0_30 = arith.constant 0 : index
    %96 = vector.load %arg13[%c19, %c0_30] : memref<40x128xf32, #tpu.memory_space<vmem>>, vector<16x128xf32>
    %c12 = arith.constant 12 : index
    %97 = memref.load %arg6[%c12] : memref<24xf32, #tpu.memory_space<smem>>
    %98 = vector.broadcast %97 : f32 to vector<16x128xf32>
    %99 = arith.mulf %98, %96 : vector<16x128xf32>
    %100 = arith.addf %83, %99 : vector<16x128xf32>
    %c13 = arith.constant 13 : index
    %101 = memref.load %arg6[%c13] : memref<24xf32, #tpu.memory_space<smem>>
    %102 = vector.broadcast %101 : f32 to vector<16x128xf32>
    %103 = arith.mulf %102, %96 : vector<16x128xf32>
    %104 = arith.addf %87, %103 : vector<16x128xf32>
    %c14 = arith.constant 14 : index
    %105 = memref.load %arg6[%c14] : memref<24xf32, #tpu.memory_space<smem>>
    %106 = vector.broadcast %105 : f32 to vector<16x128xf32>
    %107 = arith.mulf %106, %96 : vector<16x128xf32>
    %108 = arith.addf %91, %107 : vector<16x128xf32>
    %c15 = arith.constant 15 : index
    %109 = memref.load %arg6[%c15] : memref<24xf32, #tpu.memory_space<smem>>
    %110 = vector.broadcast %109 : f32 to vector<16x128xf32>
    %111 = arith.mulf %110, %96 : vector<16x128xf32>
    %112 = arith.addf %95, %111 : vector<16x128xf32>
    %c2_31 = arith.constant 2 : index
    %c0_32 = arith.constant 0 : index
    %113 = vector.load %arg13[%c2_31, %c0_32] : memref<40x128xf32, #tpu.memory_space<vmem>>, vector<16x128xf32>
    %c16 = arith.constant 16 : index
    %114 = memref.load %arg6[%c16] : memref<24xf32, #tpu.memory_space<smem>>
    %115 = vector.broadcast %114 : f32 to vector<16x128xf32>
    %116 = arith.mulf %115, %113 : vector<16x128xf32>
    %117 = arith.addf %100, %116 : vector<16x128xf32>
    %c17 = arith.constant 17 : index
    %118 = memref.load %arg6[%c17] : memref<24xf32, #tpu.memory_space<smem>>
    %119 = vector.broadcast %118 : f32 to vector<16x128xf32>
    %120 = arith.mulf %119, %113 : vector<16x128xf32>
    %121 = arith.addf %104, %120 : vector<16x128xf32>
    %c18_33 = arith.constant 18 : index
    %122 = memref.load %arg6[%c18_33] : memref<24xf32, #tpu.memory_space<smem>>
    %123 = vector.broadcast %122 : f32 to vector<16x128xf32>
    %124 = arith.mulf %123, %113 : vector<16x128xf32>
    %125 = arith.addf %108, %124 : vector<16x128xf32>
    %c19_34 = arith.constant 19 : index
    %126 = memref.load %arg6[%c19_34] : memref<24xf32, #tpu.memory_space<smem>>
    %127 = vector.broadcast %126 : f32 to vector<16x128xf32>
    %128 = arith.mulf %127, %113 : vector<16x128xf32>
    %129 = arith.addf %112, %128 : vector<16x128xf32>
    %c20 = arith.constant 20 : index
    %c0_35 = arith.constant 0 : index
    %130 = vector.load %arg13[%c20, %c0_35] : memref<40x128xf32, #tpu.memory_space<vmem>>, vector<16x128xf32>
    %c20_36 = arith.constant 20 : index
    %131 = memref.load %arg6[%c20_36] : memref<24xf32, #tpu.memory_space<smem>>
    %132 = vector.broadcast %131 : f32 to vector<16x128xf32>
    %133 = arith.mulf %132, %130 : vector<16x128xf32>
    %134 = arith.addf %117, %133 : vector<16x128xf32>
    %c21 = arith.constant 21 : index
    %135 = memref.load %arg6[%c21] : memref<24xf32, #tpu.memory_space<smem>>
    %136 = vector.broadcast %135 : f32 to vector<16x128xf32>
    %137 = arith.mulf %136, %130 : vector<16x128xf32>
    %138 = arith.addf %121, %137 : vector<16x128xf32>
    %c22 = arith.constant 22 : index
    %139 = memref.load %arg6[%c22] : memref<24xf32, #tpu.memory_space<smem>>
    %140 = vector.broadcast %139 : f32 to vector<16x128xf32>
    %141 = arith.mulf %140, %130 : vector<16x128xf32>
    %142 = arith.addf %125, %141 : vector<16x128xf32>
    %c23 = arith.constant 23 : index
    %143 = memref.load %arg6[%c23] : memref<24xf32, #tpu.memory_space<smem>>
    %144 = vector.broadcast %143 : f32 to vector<16x128xf32>
    %145 = arith.mulf %144, %130 : vector<16x128xf32>
    %146 = arith.addf %129, %145 : vector<16x128xf32>
    %c0_37 = arith.constant 0 : index
    %147 = memref.load %arg7[%c0_37] : memref<4xf32, #tpu.memory_space<smem>>
    %148 = vector.broadcast %147 : f32 to vector<16x128xf32>
    %149 = arith.addf %134, %148 : vector<16x128xf32>
    %cst_38 = arith.constant 0.000000e+00 : f32
    %150 = vector.broadcast %cst_38 : f32 to vector<16x128xf32>
    %151 = arith.maximumf %149, %150 : vector<16x128xf32>
    %c0_39 = arith.constant 0 : index
    %c0_40 = arith.constant 0 : index
    %152 = vector.load %arg14[%c0_39, %c0_40] : memref<16x128xf32, #tpu.memory_space<vmem>>, vector<16x128xf32>
    tpu.vector_store %arg14[%c0_39, %c0_40], %151 {strides = array<i32>} : memref<16x128xf32, #tpu.memory_space<vmem>>, vector<16x128xf32>,
    %c0_41 = arith.constant 0 : index
    %c0_42 = arith.constant 0 : index
    %153 = tpu.strided_load %arg14[%c0_41, %c0_42] {strides = array<i32: 2, 1>} : memref<16x128xf32, #tpu.memory_space<vmem>>, vector<8x128xf32>
    %c1_43 = arith.constant 1 : index
    %c0_44 = arith.constant 0 : index
    %154 = tpu.strided_load %arg14[%c1_43, %c0_44] {strides = array<i32: 2, 1>} : memref<16x128xf32, #tpu.memory_space<vmem>>, vector<8x128xf32>
    %155 = arith.maximumf %153, %154 : vector<8x128xf32>
    %c1_45 = arith.constant 1 : index
    %156 = memref.load %arg7[%c1_45] : memref<4xf32, #tpu.memory_space<smem>>
    %157 = vector.broadcast %156 : f32 to vector<16x128xf32>
    %158 = arith.addf %138, %157 : vector<16x128xf32>
    %cst_46 = arith.constant 0.000000e+00 : f32
    %159 = vector.broadcast %cst_46 : f32 to vector<16x128xf32>
    %160 = arith.maximumf %158, %159 : vector<16x128xf32>
    %c0_47 = arith.constant 0 : index
    %c0_48 = arith.constant 0 : index
    %161 = vector.load %arg14[%c0_47, %c0_48] : memref<16x128xf32, #tpu.memory_space<vmem>>, vector<16x128xf32>
    tpu.vector_store %arg14[%c0_47, %c0_48], %160 {strides = array<i32>} : memref<16x128xf32, #tpu.memory_space<vmem>>, vector<16x128xf32>,
    %c0_49 = arith.constant 0 : index
    %c0_50 = arith.constant 0 : index
    %162 = tpu.strided_load %arg14[%c0_49, %c0_50] {strides = array<i32: 2, 1>} : memref<16x128xf32, #tpu.memory_space<vmem>>, vector<8x128xf32>
    %c1_51 = arith.constant 1 : index
    %c0_52 = arith.constant 0 : index
    %163 = tpu.strided_load %arg14[%c1_51, %c0_52] {strides = array<i32: 2, 1>} : memref<16x128xf32, #tpu.memory_space<vmem>>, vector<8x128xf32>
    %164 = arith.maximumf %162, %163 : vector<8x128xf32>
    %c2_53 = arith.constant 2 : index
    %165 = memref.load %arg7[%c2_53] : memref<4xf32, #tpu.memory_space<smem>>
    %166 = vector.broadcast %165 : f32 to vector<16x128xf32>
    %167 = arith.addf %142, %166 : vector<16x128xf32>
    %cst_54 = arith.constant 0.000000e+00 : f32
    %168 = vector.broadcast %cst_54 : f32 to vector<16x128xf32>
    %169 = arith.maximumf %167, %168 : vector<16x128xf32>
    %c0_55 = arith.constant 0 : index
    %c0_56 = arith.constant 0 : index
    %170 = vector.load %arg14[%c0_55, %c0_56] : memref<16x128xf32, #tpu.memory_space<vmem>>, vector<16x128xf32>
    tpu.vector_store %arg14[%c0_55, %c0_56], %169 {strides = array<i32>} : memref<16x128xf32, #tpu.memory_space<vmem>>, vector<16x128xf32>,
    %c0_57 = arith.constant 0 : index
    %c0_58 = arith.constant 0 : index
    %171 = tpu.strided_load %arg14[%c0_57, %c0_58] {strides = array<i32: 2, 1>} : memref<16x128xf32, #tpu.memory_space<vmem>>, vector<8x128xf32>
    %c1_59 = arith.constant 1 : index
    %c0_60 = arith.constant 0 : index
    %172 = tpu.strided_load %arg14[%c1_59, %c0_60] {strides = array<i32: 2, 1>} : memref<16x128xf32, #tpu.memory_space<vmem>>, vector<8x128xf32>
    %173 = arith.maximumf %171, %172 : vector<8x128xf32>
    %c3_61 = arith.constant 3 : index
    %174 = memref.load %arg7[%c3_61] : memref<4xf32, #tpu.memory_space<smem>>
    %175 = vector.broadcast %174 : f32 to vector<16x128xf32>
    %176 = arith.addf %146, %175 : vector<16x128xf32>
    %cst_62 = arith.constant 0.000000e+00 : f32
    %177 = vector.broadcast %cst_62 : f32 to vector<16x128xf32>
    %178 = arith.maximumf %176, %177 : vector<16x128xf32>
    %c0_63 = arith.constant 0 : index
    %c0_64 = arith.constant 0 : index
    %179 = vector.load %arg14[%c0_63, %c0_64] : memref<16x128xf32, #tpu.memory_space<vmem>>, vector<16x128xf32>
    tpu.vector_store %arg14[%c0_63, %c0_64], %178 {strides = array<i32>} : memref<16x128xf32, #tpu.memory_space<vmem>>, vector<16x128xf32>,
    %c0_65 = arith.constant 0 : index
    %c0_66 = arith.constant 0 : index
    %180 = tpu.strided_load %arg14[%c0_65, %c0_66] {strides = array<i32: 2, 1>} : memref<16x128xf32, #tpu.memory_space<vmem>>, vector<8x128xf32>
    %c1_67 = arith.constant 1 : index
    %c0_68 = arith.constant 0 : index
    %181 = tpu.strided_load %arg14[%c1_67, %c0_68] {strides = array<i32: 2, 1>} : memref<16x128xf32, #tpu.memory_space<vmem>>, vector<8x128xf32>
    %182 = arith.maximumf %180, %181 : vector<8x128xf32>
    %cst_69 = arith.constant dense<0.000000e+00> : vector<128xf32>
    %183 = vector.multi_reduction <add>, %155, %cst_69 [0] : vector<8x128xf32> to vector<128xf32>
    %184 = vector.shape_cast %183 : vector<128xf32> to vector<1x128xf32>
    %185 = arith.mulf %155, %155 : vector<8x128xf32>
    %cst_70 = arith.constant dense<0.000000e+00> : vector<128xf32>
    %186 = vector.multi_reduction <add>, %185, %cst_70 [0] : vector<8x128xf32> to vector<128xf32>
    %187 = vector.shape_cast %186 : vector<128xf32> to vector<1x128xf32>
    %cst_71 = arith.constant dense<0.000000e+00> : vector<128xf32>
    %188 = vector.multi_reduction <add>, %164, %cst_71 [0] : vector<8x128xf32> to vector<128xf32>
    %189 = vector.shape_cast %188 : vector<128xf32> to vector<1x128xf32>
    %190 = arith.mulf %164, %164 : vector<8x128xf32>
    %cst_72 = arith.constant dense<0.000000e+00> : vector<128xf32>
    %191 = vector.multi_reduction <add>, %190, %cst_72 [0] : vector<8x128xf32> to vector<128xf32>
    %192 = vector.shape_cast %191 : vector<128xf32> to vector<1x128xf32>
    %193 = arith.addf %184, %189 : vector<1x128xf32>
    %194 = arith.addf %187, %192 : vector<1x128xf32>
    %cst_73 = arith.constant dense<0.000000e+00> : vector<128xf32>
    %195 = vector.multi_reduction <add>, %173, %cst_73 [0] : vector<8x128xf32> to vector<128xf32>
    %196 = vector.shape_cast %195 : vector<128xf32> to vector<1x128xf32>
    %197 = arith.mulf %173, %173 : vector<8x128xf32>
    %cst_74 = arith.constant dense<0.000000e+00> : vector<128xf32>
    %198 = vector.multi_reduction <add>, %197, %cst_74 [0] : vector<8x128xf32> to vector<128xf32>
    %199 = vector.shape_cast %198 : vector<128xf32> to vector<1x128xf32>
    %200 = arith.addf %193, %196 : vector<1x128xf32>
    %201 = arith.addf %194, %199 : vector<1x128xf32>
    %cst_75 = arith.constant dense<0.000000e+00> : vector<128xf32>
    %202 = vector.multi_reduction <add>, %182, %cst_75 [0] : vector<8x128xf32> to vector<128xf32>
    %203 = vector.shape_cast %202 : vector<128xf32> to vector<1x128xf32>
    %204 = arith.mulf %182, %182 : vector<8x128xf32>
    %cst_76 = arith.constant dense<0.000000e+00> : vector<128xf32>
    %205 = vector.multi_reduction <add>, %204, %cst_76 [0] : vector<8x128xf32> to vector<128xf32>
    %206 = vector.shape_cast %205 : vector<128xf32> to vector<1x128xf32>
    %207 = arith.addf %200, %203 : vector<1x128xf32>
    %208 = arith.addf %201, %206 : vector<1x128xf32>
    %cst_77 = arith.constant 3.125000e-02 : f32
    %209 = vector.broadcast %cst_77 : f32 to vector<1x128xf32>
    %210 = arith.mulf %207, %209 : vector<1x128xf32>
    %cst_78 = arith.constant 3.125000e-02 : f32
    %211 = vector.broadcast %cst_78 : f32 to vector<1x128xf32>
    %212 = arith.mulf %208, %211 : vector<1x128xf32>
    %213 = arith.mulf %210, %210 : vector<1x128xf32>
    %214 = arith.subf %212, %213 : vector<1x128xf32>
    %cst_79 = arith.constant 0.000000e+00 : f32
    %215 = vector.broadcast %cst_79 : f32 to vector<1x128xf32>
    %216 = arith.maximumf %214, %215 : vector<1x128xf32>
    %cst_80 = arith.constant 9.99999974E-6 : f32
    %217 = vector.broadcast %cst_80 : f32 to vector<1x128xf32>
    %218 = arith.addf %216, %217 : vector<1x128xf32>
    %219 = math.rsqrt %218 : vector<1x128xf32>
    %c0_81 = arith.constant 0 : index
    %c0_82 = arith.constant 0 : index
    %220 = vector.load %arg8[%c0_81, %c0_82] : memref<32x1xf32, #tpu.memory_space<vmem>>, vector<8x1xf32>
    %c0_83 = arith.constant 0 : index
    %c0_84 = arith.constant 0 : index
    %221 = vector.load %arg9[%c0_83, %c0_84] : memref<32x1xf32, #tpu.memory_space<vmem>>, vector<8x1xf32>
    %222 = vector.broadcast %210 : vector<1x128xf32> to vector<8x128xf32>
    %223 = arith.subf %155, %222 : vector<8x128xf32>
    %224 = vector.broadcast %219 : vector<1x128xf32> to vector<8x128xf32>
    %225 = arith.mulf %223, %224 : vector<8x128xf32>
    %226 = vector.broadcast %220 : vector<8x1xf32> to vector<8x128xf32>
    %227 = arith.mulf %225, %226 : vector<8x128xf32>
    %228 = vector.broadcast %221 : vector<8x1xf32> to vector<8x128xf32>
    %229 = arith.addf %227, %228 : vector<8x128xf32>
    %c0_85 = arith.constant 0 : index
    %c0_86 = arith.constant 0 : index
    %230 = vector.load %arg13[%c0_85, %c0_86] : memref<40x128xf32, #tpu.memory_space<vmem>>, vector<8x128xf32>
    tpu.vector_store %arg13[%c0_85, %c0_86], %229 {strides = array<i32>} : memref<40x128xf32, #tpu.memory_space<vmem>>, vector<8x128xf32>,
    %c8_87 = arith.constant 8 : index
    %c0_88 = arith.constant 0 : index
    %231 = vector.load %arg8[%c8_87, %c0_88] : memref<32x1xf32, #tpu.memory_space<vmem>>, vector<8x1xf32>
    %c8_89 = arith.constant 8 : index
    %c0_90 = arith.constant 0 : index
    %232 = vector.load %arg9[%c8_89, %c0_90] : memref<32x1xf32, #tpu.memory_space<vmem>>, vector<8x1xf32>
    %233 = vector.broadcast %210 : vector<1x128xf32> to vector<8x128xf32>
    %234 = arith.subf %164, %233 : vector<8x128xf32>
    %235 = vector.broadcast %219 : vector<1x128xf32> to vector<8x128xf32>
    %236 = arith.mulf %234, %235 : vector<8x128xf32>
    %237 = vector.broadcast %231 : vector<8x1xf32> to vector<8x128xf32>
    %238 = arith.mulf %236, %237 : vector<8x128xf32>
    %239 = vector.broadcast %232 : vector<8x1xf32> to vector<8x128xf32>
    %240 = arith.addf %238, %239 : vector<8x128xf32>
    %c8_91 = arith.constant 8 : index
    %c0_92 = arith.constant 0 : index
    %241 = vector.load %arg13[%c8_91, %c0_92] : memref<40x128xf32, #tpu.memory_space<vmem>>, vector<8x128xf32>
    tpu.vector_store %arg13[%c8_91, %c0_92], %240 {strides = array<i32>} : memref<40x128xf32, #tpu.memory_space<vmem>>, vector<8x128xf32>,
    %c16_93 = arith.constant 16 : index
    %c0_94 = arith.constant 0 : index
    %242 = vector.load %arg8[%c16_93, %c0_94] : memref<32x1xf32, #tpu.memory_space<vmem>>, vector<8x1xf32>
    %c16_95 = arith.constant 16 : index
    %c0_96 = arith.constant 0 : index
    %243 = vector.load %arg9[%c16_95, %c0_96] : memref<32x1xf32, #tpu.memory_space<vmem>>, vector<8x1xf32>
    %244 = vector.broadcast %210 : vector<1x128xf32> to vector<8x128xf32>
    %245 = arith.subf %173, %244 : vector<8x128xf32>
    %246 = vector.broadcast %219 : vector<1x128xf32> to vector<8x128xf32>
    %247 = arith.mulf %245, %246 : vector<8x128xf32>
    %248 = vector.broadcast %242 : vector<8x1xf32> to vector<8x128xf32>
    %249 = arith.mulf %247, %248 : vector<8x128xf32>
    %250 = vector.broadcast %243 : vector<8x1xf32> to vector<8x128xf32>
    %251 = arith.addf %249, %250 : vector<8x128xf32>
    %c16_97 = arith.constant 16 : index
    %c0_98 = arith.constant 0 : index
    %252 = vector.load %arg13[%c16_97, %c0_98] : memref<40x128xf32, #tpu.memory_space<vmem>>, vector<8x128xf32>
    tpu.vector_store %arg13[%c16_97, %c0_98], %251 {strides = array<i32>} : memref<40x128xf32, #tpu.memory_space<vmem>>, vector<8x128xf32>,
    %c24 = arith.constant 24 : index
    %c0_99 = arith.constant 0 : index
    %253 = vector.load %arg8[%c24, %c0_99] : memref<32x1xf32, #tpu.memory_space<vmem>>, vector<8x1xf32>
    %c24_100 = arith.constant 24 : index
    %c0_101 = arith.constant 0 : index
    %254 = vector.load %arg9[%c24_100, %c0_101] : memref<32x1xf32, #tpu.memory_space<vmem>>, vector<8x1xf32>
    %255 = vector.broadcast %210 : vector<1x128xf32> to vector<8x128xf32>
    %256 = arith.subf %182, %255 : vector<8x128xf32>
    %257 = vector.broadcast %219 : vector<1x128xf32> to vector<8x128xf32>
    %258 = arith.mulf %256, %257 : vector<8x128xf32>
    %259 = vector.broadcast %253 : vector<8x1xf32> to vector<8x128xf32>
    %260 = arith.mulf %258, %259 : vector<8x128xf32>
    %261 = vector.broadcast %254 : vector<8x1xf32> to vector<8x128xf32>
    %262 = arith.addf %260, %261 : vector<8x128xf32>
    %c24_102 = arith.constant 24 : index
    %c0_103 = arith.constant 0 : index
    %263 = vector.load %arg13[%c24_102, %c0_103] : memref<40x128xf32, #tpu.memory_space<vmem>>, vector<8x128xf32>
    tpu.vector_store %arg13[%c24_102, %c0_103], %262 {strides = array<i32>} : memref<40x128xf32, #tpu.memory_space<vmem>>, vector<8x128xf32>,
    %c0_104 = arith.constant 0 : index
    %c0_105 = arith.constant 0 : index
    %264 = vector.load %arg13[%c0_104, %c0_105] : memref<40x128xf32, #tpu.memory_space<vmem>>, vector<6x128xf32>
    %c0_106 = arith.constant 0 : index
    %265 = memref.load %arg10[%c0_106] : memref<12xf32, #tpu.memory_space<smem>>
    %266 = vector.broadcast %265 : f32 to vector<6x128xf32>
    %267 = arith.mulf %266, %264 : vector<6x128xf32>
    %c8_107 = arith.constant 8 : index
    %c0_108 = arith.constant 0 : index
    %268 = vector.load %arg13[%c8_107, %c0_108] : memref<40x128xf32, #tpu.memory_space<vmem>>, vector<6x128xf32>
    %c1_109 = arith.constant 1 : index
    %269 = memref.load %arg10[%c1_109] : memref<12xf32, #tpu.memory_space<smem>>
    %270 = vector.broadcast %269 : f32 to vector<6x128xf32>
    %271 = arith.mulf %270, %268 : vector<6x128xf32>
    %272 = arith.addf %267, %271 : vector<6x128xf32>
    %c16_110 = arith.constant 16 : index
    %c0_111 = arith.constant 0 : index
    %273 = vector.load %arg13[%c16_110, %c0_111] : memref<40x128xf32, #tpu.memory_space<vmem>>, vector<6x128xf32>
    %c2_112 = arith.constant 2 : index
    %274 = memref.load %arg10[%c2_112] : memref<12xf32, #tpu.memory_space<smem>>
    %275 = vector.broadcast %274 : f32 to vector<6x128xf32>
    %276 = arith.mulf %275, %273 : vector<6x128xf32>
    %277 = arith.addf %272, %276 : vector<6x128xf32>
    %c24_113 = arith.constant 24 : index
    %c0_114 = arith.constant 0 : index
    %278 = vector.load %arg13[%c24_113, %c0_114] : memref<40x128xf32, #tpu.memory_space<vmem>>, vector<6x128xf32>
    %c3_115 = arith.constant 3 : index
    %279 = memref.load %arg10[%c3_115] : memref<12xf32, #tpu.memory_space<smem>>
    %280 = vector.broadcast %279 : f32 to vector<6x128xf32>
    %281 = arith.mulf %280, %278 : vector<6x128xf32>
    %282 = arith.addf %277, %281 : vector<6x128xf32>
    %c1_116 = arith.constant 1 : index
    %c0_117 = arith.constant 0 : index
    %283 = vector.load %arg13[%c1_116, %c0_117] : memref<40x128xf32, #tpu.memory_space<vmem>>, vector<6x128xf32>
    %c4_118 = arith.constant 4 : index
    %284 = memref.load %arg10[%c4_118] : memref<12xf32, #tpu.memory_space<smem>>
    %285 = vector.broadcast %284 : f32 to vector<6x128xf32>
    %286 = arith.mulf %285, %283 : vector<6x128xf32>
    %287 = arith.addf %282, %286 : vector<6x128xf32>
    %c9_119 = arith.constant 9 : index
    %c0_120 = arith.constant 0 : index
    %288 = vector.load %arg13[%c9_119, %c0_120] : memref<40x128xf32, #tpu.memory_space<vmem>>, vector<6x128xf32>
    %c5_121 = arith.constant 5 : index
    %289 = memref.load %arg10[%c5_121] : memref<12xf32, #tpu.memory_space<smem>>
    %290 = vector.broadcast %289 : f32 to vector<6x128xf32>
    %291 = arith.mulf %290, %288 : vector<6x128xf32>
    %292 = arith.addf %287, %291 : vector<6x128xf32>
    %c17_122 = arith.constant 17 : index
    %c0_123 = arith.constant 0 : index
    %293 = vector.load %arg13[%c17_122, %c0_123] : memref<40x128xf32, #tpu.memory_space<vmem>>, vector<6x128xf32>
    %c6_124 = arith.constant 6 : index
    %294 = memref.load %arg10[%c6_124] : memref<12xf32, #tpu.memory_space<smem>>
    %295 = vector.broadcast %294 : f32 to vector<6x128xf32>
    %296 = arith.mulf %295, %293 : vector<6x128xf32>
    %297 = arith.addf %292, %296 : vector<6x128xf32>
    %c25 = arith.constant 25 : index
    %c0_125 = arith.constant 0 : index
    %298 = vector.load %arg13[%c25, %c0_125] : memref<40x128xf32, #tpu.memory_space<vmem>>, vector<6x128xf32>
    %c7_126 = arith.constant 7 : index
    %299 = memref.load %arg10[%c7_126] : memref<12xf32, #tpu.memory_space<smem>>
    %300 = vector.broadcast %299 : f32 to vector<6x128xf32>
    %301 = arith.mulf %300, %298 : vector<6x128xf32>
    %302 = arith.addf %297, %301 : vector<6x128xf32>
    %c2_127 = arith.constant 2 : index
    %c0_128 = arith.constant 0 : index
    %303 = vector.load %arg13[%c2_127, %c0_128] : memref<40x128xf32, #tpu.memory_space<vmem>>, vector<6x128xf32>
    %c8_129 = arith.constant 8 : index
    %304 = memref.load %arg10[%c8_129] : memref<12xf32, #tpu.memory_space<smem>>
    %305 = vector.broadcast %304 : f32 to vector<6x128xf32>
    %306 = arith.mulf %305, %303 : vector<6x128xf32>
    %307 = arith.addf %302, %306 : vector<6x128xf32>
    %c10_130 = arith.constant 10 : index
    %c0_131 = arith.constant 0 : index
    %308 = vector.load %arg13[%c10_130, %c0_131] : memref<40x128xf32, #tpu.memory_space<vmem>>, vector<6x128xf32>
    %c9_132 = arith.constant 9 : index
    %309 = memref.load %arg10[%c9_132] : memref<12xf32, #tpu.memory_space<smem>>
    %310 = vector.broadcast %309 : f32 to vector<6x128xf32>
    %311 = arith.mulf %310, %308 : vector<6x128xf32>
    %312 = arith.addf %307, %311 : vector<6x128xf32>
    %c18_133 = arith.constant 18 : index
    %c0_134 = arith.constant 0 : index
    %313 = vector.load %arg13[%c18_133, %c0_134] : memref<40x128xf32, #tpu.memory_space<vmem>>, vector<6x128xf32>
    %c10_135 = arith.constant 10 : index
    %314 = memref.load %arg10[%c10_135] : memref<12xf32, #tpu.memory_space<smem>>
    %315 = vector.broadcast %314 : f32 to vector<6x128xf32>
    %316 = arith.mulf %315, %313 : vector<6x128xf32>
    %317 = arith.addf %312, %316 : vector<6x128xf32>
    %c26 = arith.constant 26 : index
    %c0_136 = arith.constant 0 : index
    %318 = vector.load %arg13[%c26, %c0_136] : memref<40x128xf32, #tpu.memory_space<vmem>>, vector<6x128xf32>
    %c11_137 = arith.constant 11 : index
    %319 = memref.load %arg10[%c11_137] : memref<12xf32, #tpu.memory_space<smem>>
    %320 = vector.broadcast %319 : f32 to vector<6x128xf32>
    %321 = arith.mulf %320, %318 : vector<6x128xf32>
    %322 = arith.addf %317, %321 : vector<6x128xf32>
    %c0_138 = arith.constant 0 : index
    %323 = memref.load %arg11[%c0_138] : memref<1xf32, #tpu.memory_space<smem>>
    %324 = vector.broadcast %323 : f32 to vector<6x128xf32>
    %325 = arith.addf %322, %324 : vector<6x128xf32>
    %cst_139 = arith.constant 0.000000e+00 : f32
    %326 = vector.broadcast %cst_139 : f32 to vector<6x128xf32>
    %327 = arith.maximumf %325, %326 : vector<6x128xf32>
    %c0_140 = arith.constant 0 : index
    %c0_141 = arith.constant 0 : index
    %c0_142 = arith.constant 0 : index
    %328 = vector.load %arg12[%c0_140, %c0_141, %c0_142] : memref<1x6x128xf32, #tpu.memory_space<vmem>>, vector<1x6x128xf32>
    %329 = vector.shape_cast %328 : vector<1x6x128xf32> to vector<6x128xf32>
    %330 = vector.shape_cast %327 : vector<6x128xf32> to vector<1x6x128xf32>
    tpu.vector_store %arg12[%c0_140, %c0_141, %c0_142], %330 {strides = array<i32>} : memref<1x6x128xf32, #tpu.memory_space<vmem>>, vector<1x6x128xf32>,
    return
  }
  func.func @transform_0(%arg0: i32, %arg1: i32) -> (i32, i32, i32) {
    %c0_i32 = arith.constant 0 : i32
    %c0_i32_0 = arith.constant 0 : i32
    return %arg0, %c0_i32, %arg1 : i32, i32, i32
  }
  func.func @transform_1(%arg0: i32, %arg1: i32) -> (i32, i32, i32) {
    %c0_i32 = arith.constant 0 : i32
    %c0_i32_0 = arith.constant 0 : i32
    return %arg0, %c0_i32, %arg1 : i32, i32, i32
  }
  func.func @transform_2(%arg0: i32, %arg1: i32) -> (i32, i32) {
    %c0_i32 = arith.constant 0 : i32
    %c0_i32_0 = arith.constant 0 : i32
    %c0_i32_1 = arith.constant 0 : i32
    return %c0_i32, %c0_i32_0 : i32, i32
  }
  func.func @transform_3(%arg0: i32, %arg1: i32) -> (i32, i32) {
    %c0_i32 = arith.constant 0 : i32
    %c0_i32_0 = arith.constant 0 : i32
    %c0_i32_1 = arith.constant 0 : i32
    return %c0_i32, %c0_i32_0 : i32, i32
  }
  func.func @transform_4(%arg0: i32, %arg1: i32) -> i32 {
    %c0_i32 = arith.constant 0 : i32
    %c0_i32_0 = arith.constant 0 : i32
    return %c0_i32 : i32
  }
  func.func @transform_5(%arg0: i32, %arg1: i32) -> i32 {
    %c0_i32 = arith.constant 0 : i32
    %c0_i32_0 = arith.constant 0 : i32
    return %c0_i32 : i32
  }
  func.func @transform_6(%arg0: i32, %arg1: i32) -> (i32, i32) {
    %c0_i32 = arith.constant 0 : i32
    %c0_i32_0 = arith.constant 0 : i32
    %c0_i32_1 = arith.constant 0 : i32
    return %c0_i32, %c0_i32_0 : i32, i32
  }
  func.func @transform_7(%arg0: i32, %arg1: i32) -> (i32, i32) {
    %c0_i32 = arith.constant 0 : i32
    %c0_i32_0 = arith.constant 0 : i32
    %c0_i32_1 = arith.constant 0 : i32
    return %c0_i32, %c0_i32_0 : i32, i32
  }
  func.func @transform_8(%arg0: i32, %arg1: i32) -> i32 {
    %c0_i32 = arith.constant 0 : i32
    %c0_i32_0 = arith.constant 0 : i32
    return %c0_i32 : i32
  }
  func.func @transform_9(%arg0: i32, %arg1: i32) -> i32 {
    %c0_i32 = arith.constant 0 : i32
    %c0_i32_0 = arith.constant 0 : i32
    return %c0_i32 : i32
  }
  func.func @transform_10(%arg0: i32, %arg1: i32) -> (i32, i32, i32) {
    %c0_i32 = arith.constant 0 : i32
    %c0_i32_0 = arith.constant 0 : i32
    return %arg0, %c0_i32, %arg1 : i32, i32, i32
  }
}

</mosaic_0001>

<llo_original>
// kernel: tpu_custom_call.1
$region0: #{tpu_custom_call.1}
  #allocation0 [shape = 'u32[]', space=smem, size = 0x4, offset = 0x4, fixed_abs, tag = 'smem constant byte address 0x4 - core index']
  #allocation1 [shape = 'u32[144,128]{1,0:T(1,128)}', space=vmem, size = 0x12000, scoped, tag = 'internal scratch']
  #allocation2 [shape = 'f32[40,128]{1,0:T(8,128)}', space=vmem, size = 0x5000, scoped, tag = 'scratch operand']
  #allocation3 [shape = 'f32[16,128]{1,0:T(8,128)}', space=vmem, size = 0x2000, scoped, tag = 'scratch operand']
  #allocation4 [shape = 'f32[1]{0:T(128)S(6)}', space=smem, size = 0x200, scoped, tag = 'scoped memory for tpu_custom_call.1']
  %s0 = inlined_call_operand.vmem [shape: f32[2,18,128], index: 0, kind: input, shape index: {}]
  %s1 = inlined_call_operand.vmem [shape: f32[2,18,128], index: 1, kind: input, shape index: {}]
  %s2 = inlined_call_operand.vmem [shape: f32[36,1], index: 2, kind: input, shape index: {}]
  %s3 = inlined_call_operand.vmem [shape: f32[36,1], index: 3, kind: input, shape index: {}]
  %s4 = inlined_call_operand.vmem [shape: f32[24], index: 4, kind: input, shape index: {}]
  %s5 = inlined_call_operand.vmem [shape: f32[4], index: 5, kind: input, shape index: {}]
  %s6 = inlined_call_operand.vmem [shape: f32[32,1], index: 6, kind: input, shape index: {}]
  %s7 = inlined_call_operand.vmem [shape: f32[32,1], index: 7, kind: input, shape index: {}]
  %s8 = inlined_call_operand.vmem [shape: f32[12], index: 8, kind: input, shape index: {}]
  %s9 = inlined_call_operand.<no memory space> [shape: f32[1], index: 9, kind: input, shape index: {}]
  %s10 = inlined_call_operand.vmem [shape: f32[2,6,128], index: 10, kind: output, shape index: {}]
  %s11 = sld [smem:[#allocation0]]
  $region85: #{tpu_custom_call.1} parent=0
    _
  %s13 = ssub.s32 1, %s11
  %s14 = scalar_select 0, %s13, %s11
  %15 = sst [smem:[#allocation4]] %s9
  $region1: #{tpu_custom_call.1} parent=0
    #allocation5 [shape = 'u8[512]{0}', space=smem, size = 0x200, scoped, tag = 'input window, operand 4, single buffered']
    #allocation6 [shape = 's32[2]{0}', space=sflag, size = 0x8, scoped, tag = 'scoped memory for tpu_custom_call.1']
    #allocation7 [shape = 'u8[512]{0}', space=smem, size = 0x200, scoped, tag = 'input window, operand 5, single buffered']
    #allocation8 [shape = 's32[1]{0}', space=sflag, size = 0x4, scoped, tag = 'scoped memory for tpu_custom_call.1']
    #allocation9 [shape = 'u8[512]{0}', space=smem, size = 0x200, scoped, tag = 'input window, operand 8, single buffered']
    %16 = vsyncpa [#allocation6], 0
    %17 = vsyncpa [#allocation8], 0
    loop: start=0, step=1, limit=4
    $region2: #{tpu_custom_call.1} parent=1 // loop_pre_header
      _
    $region3: #{tpu_custom_call.1} parent=1 // loop_header
      %s19 = sphi 0, %s23
      %p20 = scmp.ge.s32.totalorder %s19, 4
      %s26 = sphi 0, %s38
      %s27 = sphi 0, %s34
      %s28 = sphi 0, %s26
      %s29 = sphi 0, %s27
      %s30 = sphi 0, %s28
      %s31 = sphi 0, %s29
      %s43 = sphi 0, %s45
      %s46 = sphi 0, %s43
      %s47 = sphi 0, %s46
      %s63 = sphi 0, %s47
      %s71 = sphi 0, %s73
      %s74 = sphi 0, %s71
      %s75 = sphi 0, %s74
      %s91 = sphi 0, %s75
      %s95 = sphi 0, %s95
      %s97 = sphi 0, %s95
      %s98 = sphi 0, %s97
      %s112 = sphi 0, %s98
      %s116 = sphi 0, %s116
      %s118 = sphi 0, %s116
      %s119 = sphi 0, %s118
      %s133 = sphi 0, %s119
      %s137 = sphi 0, %s137
      %s139 = sphi 0, %s137
      %s140 = sphi 0, %s139
      %s154 = sphi 0, %s140
      %s158 = sphi 0, %s158
      %s160 = sphi 0, %s158
      %s161 = sphi 0, %s160
      %s175 = sphi 0, %s161
      %s179 = sphi 0, %s179
      %s181 = sphi 0, %s179
      %s182 = sphi 0, %s181
      %s196 = sphi 0, %s182
      %s200 = sphi 0, %s200
      %s202 = sphi 0, %s200
      %s203 = sphi 0, %s202
      %s217 = sphi 0, %s203
      %s221 = sphi 0, %s221
      %s223 = sphi 0, %s221
      %s224 = sphi 0, %s223
      %s238 = sphi 0, %s224
      %s242 = sphi 0, %s242
      %s244 = sphi 0, %s242
      %s245 = sphi 0, %s244
      %s259 = sphi 0, %s245
      %s267 = sphi 0, %s269
      %s270 = sphi 0, %s267
      %s271 = sphi 0, %s270
      %s287 = sphi 0, %s271
    $region4: #{tpu_custom_call.1} parent=1 // loop_header_branch
      %22 = sbr.rel (%p20) target = $region8
    $region5: #{tpu_custom_call.1} parent=1 // loop_body
      %s24 = ssub.s32 %s19, 1
      %s25 = ssub.s32 %s19, 2
      %s32 = sadd.s32 1, %s27
      %p33 = scmp.ge.s32.totalorder %s32, 1
      %s34 = scalar_select %p33, 0, %s32
      %s35 = sadd.s32 1, %s26
      %s36 = scalar_select %p33, %s35, %s26
      %p37 = scmp.ge.s32.totalorder %s36, 2
      %s38 = scalar_select %p37, 0, %s36
      %s39 = ssub.s32 %s26, %s38
      %s40 = ssub.s32 %s27, %s34
      %s41 = sor.u32 %s39, %s40
      %p42 = scmp.eq.s32.totalorder %s41, 0
      %s44 = sadd.s32 %s43, 1
      %s45 = scalar_select %p42, %s43, %s44
      %p48 = pneg %p42
      %p49 = scmp.eq.s32.totalorder %s19, 1
      %p50 = por %p48, %p49
      %p51 = scmp.ne.s32.totalorder %s43, %s46
      %p52 = scmp.eq.s32.totalorder %s19, 0
      %p53 = por %p51, %p52
      %p54 = scmp.ne.s32.totalorder %s43, %s46
      %p55 = scmp.eq.s32.totalorder %s24, 1
      %p56 = por %p54, %p55
      %p57 = scmp.ne.s32.totalorder %s46, %s47
      %p58 = scmp.eq.s32.totalorder %s24, 0
      %p59 = por %p57, %p58
      %p60 = scmp.ne.s32.totalorder %s46, %s47
      %p61 = scmp.eq.s32.totalorder %s25, 1
      %p62 = por %p60, %p61
      %p64 = scmp.ne.s32.totalorder %s47, %s63
      %p65 = scmp.eq.s32.totalorder %s25, 0
      %p66 = por %p64, %p65
      %s67 = ssub.s32 %s26, %s38
      %s68 = ssub.s32 %s27, %s34
      %s69 = sor.u32 %s67, %s68
      %p70 = scmp.eq.s32.totalorder %s69, 0
      %s72 = sadd.s32 %s71, 1
      %s73 = scalar_select %p70, %s71, %s72
      %p76 = pneg %p70
      %p77 = scmp.eq.s32.totalorder %s19, 1
      %p78 = por %p76, %p77
      %p79 = scmp.ne.s32.totalorder %s71, %s74
      %p80 = scmp.eq.s32.totalorder %s19, 0
      %p81 = por %p79, %p80
      %p82 = scmp.ne.s32.totalorder %s71, %s74
      %p83 = scmp.eq.s32.totalorder %s24, 1
      %p84 = por %p82, %p83
      %p85 = scmp.ne.s32.totalorder %s74, %s75
      %p86 = scmp.eq.s32.totalorder %s24, 0
      %p87 = por %p85, %p86
      %p88 = scmp.ne.s32.totalorder %s74, %s75
      %p89 = scmp.eq.s32.totalorder %s25, 1
      %p90 = por %p88, %p89
      %p92 = scmp.ne.s32.totalorder %s75, %s91
      %p93 = scmp.eq.s32.totalorder %s25, 0
      %p94 = por %p92, %p93
      %s96 = sadd.s32 %s95, 1
      %p99 = scmp.eq.s32.totalorder %s19, 1
      %p100 = scmp.ne.s32.totalorder %s95, %s97
      %p101 = scmp.eq.s32.totalorder %s19, 0
      %p102 = por %p100, %p101
      %p103 = scmp.ne.s32.totalorder %s95, %s97
      %p104 = scmp.eq.s32.totalorder %s24, 1
      %p105 = por %p103, %p104
      %p106 = scmp.ne.s32.totalorder %s97, %s98
      %p107 = scmp.eq.s32.totalorder %s24, 0
      %p108 = por %p106, %p107
      %p109 = scmp.ne.s32.totalorder %s97, %s98
      %p110 = scmp.eq.s32.totalorder %s25, 1
      %p111 = por %p109, %p110
      %p113 = scmp.ne.s32.totalorder %s98, %s112
      %p114 = scmp.eq.s32.totalorder %s25, 0
      %p115 = por %p113, %p114
      %s117 = sadd.s32 %s116, 1
      %p120 = scmp.eq.s32.totalorder %s19, 1
      %p121 = scmp.ne.s32.totalorder %s116, %s118
      %p122 = scmp.eq.s32.totalorder %s19, 0
      %p123 = por %p121, %p122
      %p124 = scmp.ne.s32.totalorder %s116, %s118
      %p125 = scmp.eq.s32.totalorder %s24, 1
      %p126 = por %p124, %p125
      %p127 = scmp.ne.s32.totalorder %s118, %s119
      %p128 = scmp.eq.s32.totalorder %s24, 0
      %p129 = por %p127, %p128
      %p130 = scmp.ne.s32.totalorder %s118, %s119
      %p131 = scmp.eq.s32.totalorder %s25, 1
      %p132 = por %p130, %p131
      %p134 = scmp.ne.s32.totalorder %s119, %s133
      %p135 = scmp.eq.s32.totalorder %s25, 0
      %p136 = por %p134, %p135
      %s138 = sadd.s32 %s137, 1
      %p141 = scmp.eq.s32.totalorder %s19, 1
      %p142 = scmp.ne.s32.totalorder %s137, %s139
      %p143 = scmp.eq.s32.totalorder %s19, 0
      %p144 = por %p142, %p143
      %p145 = scmp.ne.s32.totalorder %s137, %s139
      %p146 = scmp.eq.s32.totalorder %s24, 1
      %p147 = por %p145, %p146
      %p148 = scmp.ne.s32.totalorder %s139, %s140
      %p149 = scmp.eq.s32.totalorder %s24, 0
      %p150 = por %p148, %p149
      %p151 = scmp.ne.s32.totalorder %s139, %s140
      %p152 = scmp.eq.s32.totalorder %s25, 1
      %p153 = por %p151, %p152
      %p155 = scmp.ne.s32.totalorder %s140, %s154
      %p156 = scmp.eq.s32.totalorder %s25, 0
      %p157 = por %p155, %p156
      %s159 = sadd.s32 %s158, 1
      %p162 = scmp.eq.s32.totalorder %s19, 1
      %p163 = scmp.ne.s32.totalorder %s158, %s160
      %p164 = scmp.eq.s32.totalorder %s19, 0
      %p165 = por %p163, %p164
      %p166 = scmp.ne.s32.totalorder %s158, %s160
      %p167 = scmp.eq.s32.totalorder %s24, 1
      %p168 = por %p166, %p167
      %p169 = scmp.ne.s32.totalorder %s160, %s161
      %p170 = scmp.eq.s32.totalorder %s24, 0
      %p171 = por %p169, %p170
      %p172 = scmp.ne.s32.totalorder %s160, %s161
      %p173 = scmp.eq.s32.totalorder %s25, 1
      %p174 = por %p172, %p173
      %p176 = scmp.ne.s32.totalorder %s161, %s175
      %p177 = scmp.eq.s32.totalorder %s25, 0
      %p178 = por %p176, %p177
      %s180 = sadd.s32 %s179, 1
      %p183 = scmp.eq.s32.totalorder %s19, 1
      %p184 = scmp.ne.s32.totalorder %s179, %s181
      %p185 = scmp.eq.s32.totalorder %s19, 0
      %p186 = por %p184, %p185
      %p187 = scmp.ne.s32.totalorder %s179, %s181
      %p188 = scmp.eq.s32.totalorder %s24, 1
      %p189 = por %p187, %p188
      %p190 = scmp.ne.s32.totalorder %s181, %s182
      %p191 = scmp.eq.s32.totalorder %s24, 0
      %p192 = por %p190, %p191
      %p193 = scmp.ne.s32.totalorder %s181, %s182
      %p194 = scmp.eq.s32.totalorder %s25, 1
      %p195 = por %p193, %p194
      %p197 = scmp.ne.s32.totalorder %s182, %s196
      %p198 = scmp.eq.s32.totalorder %s25, 0
      %p199 = por %p197, %p198
      %s201 = sadd.s32 %s200, 1
      %p204 = scmp.eq.s32.totalorder %s19, 1
      %p205 = scmp.ne.s32.totalorder %s200, %s202
      %p206 = scmp.eq.s32.totalorder %s19, 0
      %p207 = por %p205, %p206
      %p208 = scmp.ne.s32.totalorder %s200, %s202
      %p209 = scmp.eq.s32.totalorder %s24, 1
      %p210 = por %p208, %p209
      %p211 = scmp.ne.s32.totalorder %s202, %s203
      %p212 = scmp.eq.s32.totalorder %s24, 0
      %p213 = por %p211, %p212
      %p214 = scmp.ne.s32.totalorder %s202, %s203
      %p215 = scmp.eq.s32.totalorder %s25, 1
      %p216 = por %p214, %p215
      %p218 = scmp.ne.s32.totalorder %s203, %s217
      %p219 = scmp.eq.s32.totalorder %s25, 0
      %p220 = por %p218, %p219
      %s222 = sadd.s32 %s221, 1
      %p225 = scmp.eq.s32.totalorder %s19, 1
      %p226 = scmp.ne.s32.totalorder %s221, %s223
      %p227 = scmp.eq.s32.totalorder %s19, 0
      %p228 = por %p226, %p227
      %p229 = scmp.ne.s32.totalorder %s221, %s223
      %p230 = scmp.eq.s32.totalorder %s24, 1
      %p231 = por %p229, %p230
      %p232 = scmp.ne.s32.totalorder %s223, %s224
      %p233 = scmp.eq.s32.totalorder %s24, 0
      %p234 = por %p232, %p233
      %p235 = scmp.ne.s32.totalorder %s223, %s224
      %p236 = scmp.eq.s32.totalorder %s25, 1
      %p237 = por %p235, %p236
      %p239 = scmp.ne.s32.totalorder %s224, %s238
      %p240 = scmp.eq.s32.totalorder %s25, 0
      %p241 = por %p239, %p240
      %s243 = sadd.s32 %s242, 1
      %p246 = scmp.eq.s32.totalorder %s19, 1
      %p247 = scmp.ne.s32.totalorder %s242, %s244
      %p248 = scmp.eq.s32.totalorder %s19, 0
      %p249 = por %p247, %p248
      %p250 = scmp.ne.s32.totalorder %s242, %s244
      %p251 = scmp.eq.s32.totalorder %s24, 1
      %p252 = por %p250, %p251
      %p253 = scmp.ne.s32.totalorder %s244, %s245
      %p254 = scmp.eq.s32.totalorder %s24, 0
      %p255 = por %p253, %p254
      %p256 = scmp.ne.s32.totalorder %s244, %s245
      %p257 = scmp.eq.s32.totalorder %s25, 1
      %p258 = por %p256, %p257
      %p260 = scmp.ne.s32.totalorder %s245, %s259
      %p261 = scmp.eq.s32.totalorder %s25, 0
      %p262 = por %p260, %p261
      %s263 = ssub.s32 %s26, %s38
      %s264 = ssub.s32 %s27, %s34
      %s265 = sor.u32 %s263, %s264
      %p266 = scmp.eq.s32.totalorder %s265, 0
      %s268 = sadd.s32 %s267, 1
      %s269 = scalar_select %p266, %s267, %s268
      %p272 = pneg %p266
      %p273 = scmp.eq.s32.totalorder %s19, 1
      %p274 = por %p272, %p273
      %p275 = scmp.ne.s32.totalorder %s267, %s270
      %p276 = scmp.eq.s32.totalorder %s19, 0
      %p277 = por %p275, %p276
      %p278 = scmp.ne.s32.totalorder %s267, %s270
      %p279 = scmp.eq.s32.totalorder %s24, 1
      %p280 = por %p278, %p279
      %p281 = scmp.ne.s32.totalorder %s270, %s271
      %p282 = scmp.eq.s32.totalorder %s24, 0
      %p283 = por %p281, %p282
      %p284 = scmp.ne.s32.totalorder %s270, %s271
      %p285 = scmp.eq.s32.totalorder %s25, 1
      %p286 = por %p284, %p285
      %p288 = scmp.ne.s32.totalorder %s271, %s287
      %p289 = scmp.eq.s32.totalorder %s25, 0
      %p290 = por %p288, %p289
      %p291 = scmp.le.s32.totalorder 1, %s19
      %p292 = scmp.lt.s32.totalorder %s19, 3
      %p293 = pnand %p291, %p292
      %p294 = pneg %p293
      // Predicated region
      $region9: #{tpu_custom_call.1} parent=5 // pred_check
        _
      $region10: #{tpu_custom_call.1} parent=5 // pred_check_branch
        %296 = sbr.rel (%p293) target = $region12
      $region11: #{tpu_custom_call.1} parent=5 // pred_region
        %s297 = ssub.s32 %s19, 1
        // Predicated region
        $region13: #{tpu_custom_call.1} parent=11 // pred_check
          %p298 = pneg %p108
        $region14: #{tpu_custom_call.1} parent=11 // pred_check_branch
          %300 = sbr.rel (%p298) target = $region16
        $region15: #{tpu_custom_call.1} parent=11 // pred_region
          _
        $region16: #{tpu_custom_call.1} parent=11 // pred_fallthru
          _
        // Predicated region
        $region17: #{tpu_custom_call.1} parent=11 // pred_check
          %p301 = pneg %p129
        $region18: #{tpu_custom_call.1} parent=11 // pred_check_branch
          %303 = sbr.rel (%p301) target = $region20
        $region19: #{tpu_custom_call.1} parent=11 // pred_region
          _
        $region20: #{tpu_custom_call.1} parent=11 // pred_fallthru
          _
        // Predicated region
        $region21: #{tpu_custom_call.1} parent=11 // pred_check
          %p304 = pneg %p150
        $region22: #{tpu_custom_call.1} parent=11 // pred_check_branch
          %306 = sbr.rel (%p304) target = $region24
        $region23: #{tpu_custom_call.1} parent=11 // pred_region
          %s308 = ssub.s32 16, 16
          %309 = vsyncadd [#allocation6], %s308
          %s311 = sshll.u32 %s4, 4
          %s312 = int_to_ptr.vmem [resolvable:$true] %s311
          %314 = dma.vmem_to_smem %s312, 16, [#allocation5], [#allocation6]
        $region24: #{tpu_custom_call.1} parent=11 // pred_fallthru
          _
        // Predicated region
        $region25: #{tpu_custom_call.1} parent=11 // pred_check
          %p315 = pneg %p171
        $region26: #{tpu_custom_call.1} parent=11 // pred_check_branch
          %317 = sbr.rel (%p315) target = $region28
        $region27: #{tpu_custom_call.1} parent=11 // pred_region
          %s319 = ssub.s32 16, 16
          %320 = vsyncadd [#allocation8], %s319
          %s322 = sshll.u32 %s5, 4
          %s323 = int_to_ptr.vmem [resolvable:$true] %s322
          %325 = dma.vmem_to_smem %s323, 16, [#allocation7], [#allocation8]
        $region28: #{tpu_custom_call.1} parent=11 // pred_fallthru
          _
        // Predicated region
        $region29: #{tpu_custom_call.1} parent=11 // pred_check
          %p326 = pneg %p192
        $region30: #{tpu_custom_call.1} parent=11 // pred_check_branch
          %328 = sbr.rel (%p326) target = $region32
        $region31: #{tpu_custom_call.1} parent=11 // pred_region
          _
        $region32: #{tpu_custom_call.1} parent=11 // pred_fallthru
          _
        // Predicated region
        $region33: #{tpu_custom_call.1} parent=11 // pred_check
          %p329 = pneg %p213
        $region34: #{tpu_custom_call.1} parent=11 // pred_check_branch
          %331 = sbr.rel (%p329) target = $region36
        $region35: #{tpu_custom_call.1} parent=11 // pred_region
          _
        $region36: #{tpu_custom_call.1} parent=11 // pred_fallthru
          _
        // Predicated region
        $region37: #{tpu_custom_call.1} parent=11 // pred_check
          %p332 = pneg %p234
        $region38: #{tpu_custom_call.1} parent=11 // pred_check_branch
          %334 = sbr.rel (%p332) target = $region40
        $region39: #{tpu_custom_call.1} parent=11 // pred_region
          %s336 = ssub.s32 16, 16
          %337 = vsyncadd [#allocation8], %s336
          %s339 = sshll.u32 %s8, 4
          %s340 = int_to_ptr.vmem [resolvable:$true] %s339
          %342 = dma.vmem_to_smem %s340, 16, [#allocation9], [#allocation8]
        $region40: #{tpu_custom_call.1} parent=11 // pred_fallthru
          _
        // Predicated region
        $region41: #{tpu_custom_call.1} parent=11 // pred_check
          %p343 = pneg %p255
        $region42: #{tpu_custom_call.1} parent=11 // pred_check_branch
          %345 = sbr.rel (%p343) target = $region44
        $region43: #{tpu_custom_call.1} parent=11 // pred_region
          _
        $region44: #{tpu_custom_call.1} parent=11 // pred_fallthru
          _
      $region12: #{tpu_custom_call.1} parent=5 // pred_fallthru
        _
      %p346 = scmp.lt.s32.totalorder %s19, 2
      // Predicated region
      $region45: #{tpu_custom_call.1} parent=5 // pred_check
        %p347 = pneg %p346
      $region46: #{tpu_custom_call.1} parent=5 // pred_check_branch
        %349 = sbr.rel (%p347) target = $region48
      $region47: #{tpu_custom_call.1} parent=5 // pred_region
        // Predicated region
        $region49: #{tpu_custom_call.1} parent=47 // pred_check
          %p350 = pneg %p53
        $region50: #{tpu_custom_call.1} parent=47 // pred_check_branch
          %352 = sbr.rel (%p350) target = $region52
        $region51: #{tpu_custom_call.1} parent=47 // pred_region
          %p353 = scmp.lt.s32.totalorder %s26, 1
          %s354 = scalar_select %p353, %s26, 1
          %p355 = scmp.lt.s32.totalorder %s27, 0
          %s356 = scalar_select %p355, %s27, 0
          %s357 = smul.addr %s354, 3
          %s358 = sadd.s32 %s356, %s357
          %s359 = smul.addr %s358, 8
          %s360 = scalar_lea.vmem %s0, %s359
        $region52: #{tpu_custom_call.1} parent=47 // pred_fallthru
          _
        // Predicated region
        $region53: #{tpu_custom_call.1} parent=47 // pred_check
          %p361 = pneg %p81
        $region54: #{tpu_custom_call.1} parent=47 // pred_check_branch
          %363 = sbr.rel (%p361) target = $region56
        $region55: #{tpu_custom_call.1} parent=47 // pred_region
          %p364 = scmp.lt.s32.totalorder %s26, 1
          %s365 = scalar_select %p364, %s26, 1
          %p366 = scmp.lt.s32.totalorder %s27, 0
          %s367 = scalar_select %p366, %s27, 0
          %s368 = smul.addr %s365, 3
          %s369 = sadd.s32 %s367, %s368
          %s370 = smul.addr %s369, 8
          %s371 = scalar_lea.vmem %s1, %s370
        $region56: #{tpu_custom_call.1} parent=47 // pred_fallthru
          _
      $region48: #{tpu_custom_call.1} parent=5 // pred_fallthru
        _
      %p372 = scmp.le.s32.totalorder 1, %s19
      %p373 = scmp.lt.s32.totalorder %s19, 3
      %p374 = pnand %p372, %p373
      %p375 = pneg %p374
      // Predicated region
      $region57: #{tpu_custom_call.1} parent=5 // pred_check
        _
      $region58: #{tpu_custom_call.1} parent=5 // pred_check_branch
        %377 = sbr.rel (%p374) target = $region60
      $region59: #{tpu_custom_call.1} parent=5 // pred_region
        %s378 = ssub.s32 %s19, 1
        // Predicated region
        $region61: #{tpu_custom_call.1} parent=59 // pred_check
          %p379 = pneg %p150
        $region62: #{tpu_custom_call.1} parent=59 // pred_check_branch
          %381 = sbr.rel (%p379) target = $region64
        $region63: #{tpu_custom_call.1} parent=59 // pred_region
          %382 = dma.done [#allocation6], 16
        $region64: #{tpu_custom_call.1} parent=59 // pred_fallthru
          _
        // Predicated region
        $region65: #{tpu_custom_call.1} parent=59 // pred_check
          %p383 = pneg %p171
        $region66: #{tpu_custom_call.1} parent=59 // pred_check_branch
          %385 = sbr.rel (%p383) target = $region68
        $region67: #{tpu_custom_call.1} parent=59 // pred_region
          %386 = dma.done [#allocation8], 16
        $region68: #{tpu_custom_call.1} parent=59 // pred_fallthru
          _
        // Predicated region
        $region69: #{tpu_custom_call.1} parent=59 // pred_check
          %p387 = pneg %p234
        $region70: #{tpu_custom_call.1} parent=59 // pred_check_branch
          %389 = sbr.rel (%p387) target = $region72
        $region71: #{tpu_custom_call.1} parent=59 // pred_region
          %390 = dma.done [#allocation8], 16
        $region72: #{tpu_custom_call.1} parent=59 // pred_fallthru
          _
        %391 = sfence
        %p392 = scmp.lt.s32.totalorder %s28, 1
        %s393 = scalar_select %p392, %s28, 1
        %p394 = scmp.lt.s32.totalorder %s29, 0
        %s395 = scalar_select %p394, %s29, 0
        %s396 = smul.addr %s393, 3
        %s397 = sadd.s32 %s395, %s396
        %s398 = smul.addr %s397, 8
        %s399 = scalar_lea.vmem %s0, %s398
        %p400 = pneg %p59
        %p401 = pneg %p56
        %p402 = scmp.lt.s32.totalorder %s28, 1
        %s403 = scalar_select %p402, %s28, 1
        %p404 = scmp.lt.s32.totalorder %s29, 0
        %s405 = scalar_select %p404, %s29, 0
        %s406 = smul.addr %s403, 3
        %s407 = sadd.s32 %s405, %s406
        %s408 = smul.addr %s407, 8
        %s409 = scalar_lea.vmem %s1, %s408
        %p410 = pneg %p87
        %p411 = pneg %p84
        %p412 = pneg %p108
        %p413 = pneg %p105
        %p414 = pneg %p129
        %p415 = pneg %p126
        %p416 = pneg %p150
        %p417 = pneg %p147
        %p418 = pneg %p171
        %p419 = pneg %p168
        %p420 = pneg %p192
        %p421 = pneg %p189
        %p422 = pneg %p213
        %p423 = pneg %p210
        %p424 = pneg %p234
        %p425 = pneg %p231
        %p426 = pneg %p255
        %p427 = pneg %p252
        %p428 = pneg %p283
        %p429 = pneg %p280
        %p430 = scmp.lt.s32.totalorder %s28, 1
        %s431 = scalar_select %p430, %s28, 1
        %p432 = scmp.lt.s32.totalorder %s29, 0
        %s433 = scalar_select %p432, %s29, 0
        %s434 = sadd.s32 %s433, %s431
        %s435 = smul.addr %s434, 8
        %s436 = scalar_lea.vmem %s10, %s435
        %p437 = scmp.lt.s32.totalorder %s28, 1
        %s438 = scalar_select %p437, %s28, 1
        %p439 = scmp.lt.s32.totalorder %s29, 0
        %s440 = scalar_select %p439, %s29, 0
        %s441 = smul.addr %s438, 3
        %s442 = sadd.s32 %s440, %s441
        %s443 = smul.addr %s442, 8
        %s444 = scalar_lea.vmem %s0, %s443
        %p445 = scmp.lt.s32.totalorder %s28, 1
        %s446 = scalar_select %p445, %s28, 1
        %p447 = scmp.lt.s32.totalorder %s29, 0
        %s448 = scalar_select %p447, %s29, 0
        %s449 = smul.addr %s446, 3
        %s450 = sadd.s32 %s448, %s449
        %s451 = smul.addr %s450, 8
        %s452 = scalar_lea.vmem %s1, %s451
        %p453 = scmp.lt.s32.totalorder %s28, 1
        %s454 = scalar_select %p453, %s28, 1
        %p455 = scmp.lt.s32.totalorder %s29, 0
        %s456 = scalar_select %p455, %s29, 0
        %s457 = sadd.s32 %s456, %s454
        %s458 = smul.addr %s457, 8
        %s459 = scalar_lea.vmem %s10, %s458
        %v460 = vld [vmem:[%s444] sm:$0xff]
        %v461 = vld [vmem:[%s444 + $0x8] sm:$0xff]
        %v462 = vld [vmem:[%s444 + $0x10] sm:$0x3]
        %v463 = vld [vmem:[%s452] sm:$0xff]
        %v464 = vld [vmem:[%s452 + $0x8] sm:$0xff]
        %v465 = vld [vmem:[%s452 + $0x10] sm:$0x3]
        %v466 = vadd.f32 %v460, %v461
        %vm467 = vcmask 1041408
        %v468 = vsel %vm467, %v462, 0.0
        %v469 = vadd.f32 %v466, %v468
        %v470 = vrot.slane %v469, 4
        %v471 = vadd.f32 %v469, %v470
        %v472 = vrot.slane %v471, 2
        %v473 = vadd.f32 %v471, %v472
        %v474 = vrot.slane %v473, 1
        %v475 = vadd.f32 %v473, %v474
        %v476 = vmul.f32 %v460, %v460
        %v477 = vmul.f32 %v461, %v461
        %v478 = vmul.f32 %v462, %v462
        %v479 = vadd.f32 %v476, %v477
        %v480 = vsel %vm467, %v478, 0.0
        %v481 = vadd.f32 %v479, %v480
        %v482 = vrot.slane %v481, 4
        %v483 = vadd.f32 %v481, %v482
        %v484 = vrot.slane %v483, 2
        %v485 = vadd.f32 %v483, %v484
        %v486 = vrot.slane %v485, 1
        %v487 = vadd.f32 %v485, %v486
        %v488 = vadd.f32 %v463, %v464
        %v489 = vsel %vm467, %v465, 0.0
        %v490 = vadd.f32 %v488, %v489
        %v491 = vrot.slane %v490, 4
        %v492 = vadd.f32 %v490, %v491
        %v493 = vrot.slane %v492, 2
        %v494 = vadd.f32 %v492, %v493
        %v495 = vrot.slane %v494, 1
        %v496 = vadd.f32 %v494, %v495
        %v497 = vmul.f32 %v463, %v463
        %v498 = vmul.f32 %v464, %v464
        %v499 = vmul.f32 %v465, %v465
        %v500 = vadd.f32 %v497, %v498
        %v501 = vsel %vm467, %v499, 0.0
        %v502 = vadd.f32 %v500, %v501
        %v503 = vrot.slane %v502, 4
        %v504 = vadd.f32 %v502, %v503
        %v505 = vrot.slane %v504, 2
        %v506 = vadd.f32 %v504, %v505
        %v507 = vrot.slane %v506, 1
        %v508 = vadd.f32 %v506, %v507
        %v509 = vadd.f32 %v475, %v496
        %v510 = vadd.f32 %v487, %v508
        %v511 = vmul.f32 %v509, 0.027777778
        %v512 = vmul.f32 %v510, 0.027777778
        %v513 = vmul.f32 %v511, %v511
        %v514 = vsub.f32 %v512, %v513
        %v515 = vmax.f32 %v514, 0.0
        %v516 = vadd.f32 %v515, 1e-05
        %v517 = vrsqrt.pop %v516
        %v518 = vld [vmem:[%s2] sm:$0xff]
        %v519 = vld [vmem:[%s2 + $0x8] sm:$0xff]
        %v520 = vld [vmem:[%s2 + $0x10] sm:$0x3]
        %v521 = vld [vmem:[%s3] sm:$0xff]
        %v522 = vld [vmem:[%s3 + $0x8] sm:$0xff]
        %v523 = vld [vmem:[%s3 + $0x10] sm:$0x3]
        %v524 = vsub.f32 %v460, %v511
        %v525 = vsub.f32 %v461, %v511
        %v526 = vsub.f32 %v462, %v511
        %v527 = vmul.f32 %v524, %v517
        %v528 = vmul.f32 %v525, %v517
        %v529 = vmul.f32 %v526, %v517
        %531 = vset.pattern.permute.xlu0 0
        %532 = vperm.xlu0 %531, %v518
        %v533 = vpop.permute.xlu0 %532
        %536 = vset.pattern.permute.xlu0 0
        %537 = vperm.xlu0 %536, %v519
        %v538 = vpop.permute.xlu0 %537
        %541 = vset.pattern.permute.xlu0 0
        %542 = vperm.xlu0 %541, %v520
        %v543 = vpop.permute.xlu0 %542
        %v545 = vmul.f32 %v527, %v533
        %v546 = vmul.f32 %v528, %v538
        %v547 = vmul.f32 %v529, %v543
        %549 = vset.pattern.permute.xlu0 0
        %550 = vperm.xlu0 %549, %v521
        %v551 = vpop.permute.xlu0 %550
        %554 = vset.pattern.permute.xlu0 0
        %555 = vperm.xlu0 %554, %v522
        %v556 = vpop.permute.xlu0 %555
        %559 = vset.pattern.permute.xlu0 0
        %560 = vperm.xlu0 %559, %v523
        %v561 = vpop.permute.xlu0 %560
        %v563 = vadd.f32 %v545, %v551
        %v564 = vadd.f32 %v546, %v556
        %v565 = vadd.f32 %v547, %v561
        %566 = vst [vmem:[#allocation2] sm:$0xff] %v563
        %567 = vst [vmem:[#allocation2 + $0x8] sm:$0xff] %v564
        %568 = vst [vmem:[#allocation2 + $0x10] sm:$0x3] %v565
        %v569 = vld [vmem:[%s2 + $0x12] sm:$0xff]
        %v570 = vld [vmem:[%s2 + $0x1a] sm:$0xff]
        %v571 = vld [vmem:[%s2 + $0x22] sm:$0x3]
        %v572 = vld [vmem:[%s3 + $0x12] sm:$0xff]
        %v573 = vld [vmem:[%s3 + $0x1a] sm:$0xff]
        %v574 = vld [vmem:[%s3 + $0x22] sm:$0x3]
        %v575 = vsub.f32 %v463, %v511
        %v576 = vsub.f32 %v464, %v511
        %v577 = vsub.f32 %v465, %v511
        %v578 = vmul.f32 %v575, %v517
        %v579 = vmul.f32 %v576, %v517
        %v580 = vmul.f32 %v577, %v517
        %582 = vset.pattern.permute.xlu0 0
        %583 = vperm.xlu0 %582, %v569
        %v584 = vpop.permute.xlu0 %583
        %587 = vset.pattern.permute.xlu0 0
        %588 = vperm.xlu0 %587, %v570
        %v589 = vpop.permute.xlu0 %588
        %592 = vset.pattern.permute.xlu0 0
        %593 = vperm.xlu0 %592, %v571
        %v594 = vpop.permute.xlu0 %593
        %v596 = vmul.f32 %v578, %v584
        %v597 = vmul.f32 %v579, %v589
        %v598 = vmul.f32 %v580, %v594
        %600 = vset.pattern.permute.xlu0 0
        %601 = vperm.xlu0 %600, %v572
        %v602 = vpop.permute.xlu0 %601
        %605 = vset.pattern.permute.xlu0 0
        %606 = vperm.xlu0 %605, %v573
        %v607 = vpop.permute.xlu0 %606
        %610 = vset.pattern.permute.xlu0 0
        %611 = vperm.xlu0 %610, %v574
        %v612 = vpop.permute.xlu0 %611
        %v614 = vadd.f32 %v596, %v602
        %v615 = vadd.f32 %v597, %v607
        %v616 = vadd.f32 %v598, %v612
        %617 = vst [vmem:[#allocation2 + $0x12] sm:$0xff] %v614
        %618 = vst [vmem:[#allocation2 + $0x1a] sm:$0xff] %v615
        %619 = vst [vmem:[#allocation2 + $0x22] sm:$0x3] %v616
        %v620 = vld [vmem:[#allocation2] sm:$0xff]
        %v621 = vld [vmem:[#allocation2 + $0x8] sm:$0xff]
        %s622 = sld [smem:[#allocation5]]
        %v623 = vstv %s622
        %v624 = vmul.f32 %v623, %v620
        %v625 = vmul.f32 %v623, %v621
        %s626 = sld [smem:[#allocation5 + $0x1]]
        %v627 = vstv %s626
        %v628 = vmul.f32 %v627, %v620
        %v629 = vmul.f32 %v627, %v621
        %s630 = sld [smem:[#allocation5 + $0x2]]
        %v631 = vstv %s630
        %v632 = vmul.f32 %v631, %v620
        %v633 = vmul.f32 %v631, %v621
        %s634 = sld [smem:[#allocation5 + $0x3]]
        %v635 = vstv %s634
        %v636 = vmul.f32 %v635, %v620
        %v637 = vmul.f32 %v635, %v621
        %v638 = vld [vmem:[#allocation2 + $0x12] sm:$0xff]
        %v639 = vld [vmem:[#allocation2 + $0x1a] sm:$0xff]
        %s640 = sld [smem:[#allocation5 + $0x4]]
        %v641 = vstv %s640
        %v642 = vmul.f32 %v641, %v638
        %v643 = vmul.f32 %v641, %v639
        %v644 = vadd.f32 %v624, %v642
        %v645 = vadd.f32 %v625, %v643
        %s646 = sld [smem:[#allocation5 + $0x5]]
        %v647 = vstv %s646
        %v648 = vmul.f32 %v647, %v638
        %v649 = vmul.f32 %v647, %v639
        %v650 = vadd.f32 %v628, %v648
        %v651 = vadd.f32 %v629, %v649
        %s652 = sld [smem:[#allocation5 + $0x6]]
        %v653 = vstv %s652
        %v654 = vmul.f32 %v653, %v638
        %v655 = vmul.f32 %v653, %v639
        %v656 = vadd.f32 %v632, %v654
        %v657 = vadd.f32 %v633, %v655
        %s658 = sld [smem:[#allocation5 + $0x7]]
        %v659 = vstv %s658
        %v660 = vmul.f32 %v659, %v638
        %v661 = vmul.f32 %v659, %v639
        %v662 = vadd.f32 %v636, %v660
        %v663 = vadd.f32 %v637, %v661
        %v664 = vld [vmem:[#allocation2 + $0x1] sm:$0xff]
        %v665 = vld [vmem:[#allocation2 + $0x9] sm:$0xff]
        %s666 = sld [smem:[#allocation5 + $0x8]]
        %v667 = vstv %s666
        %v668 = vmul.f32 %v667, %v664
        %v669 = vmul.f32 %v667, %v665
        %v670 = vadd.f32 %v644, %v668
        %v671 = vadd.f32 %v645, %v669
        %s672 = sld [smem:[#allocation5 + $0x9]]
        %v673 = vstv %s672
        %v674 = vmul.f32 %v673, %v664
        %v675 = vmul.f32 %v673, %v665
        %v676 = vadd.f32 %v650, %v674
        %v677 = vadd.f32 %v651, %v675
        %s678 = sld [smem:[#allocation5 + $0xa]]
        %v679 = vstv %s678
        %v680 = vmul.f32 %v679, %v664
        %v681 = vmul.f32 %v679, %v665
        %v682 = vadd.f32 %v656, %v680
        %v683 = vadd.f32 %v657, %v681
        %s684 = sld [smem:[#allocation5 + $0xb]]
        %v685 = vstv %s684
        %v686 = vmul.f32 %v685, %v664
        %v687 = vmul.f32 %v685, %v665
        %v688 = vadd.f32 %v662, %v686
        %v689 = vadd.f32 %v663, %v687
        %v690 = vld [vmem:[#allocation2 + $0x13] sm:$0xff]
        %v691 = vld [vmem:[#allocation2 + $0x1b] sm:$0xff]
        %s692 = sld [smem:[#allocation5 + $0xc]]
        %v693 = vstv %s692
        %v694 = vmul.f32 %v693, %v690
        %v695 = vmul.f32 %v693, %v691
        %v696 = vadd.f32 %v670, %v694
        %v697 = vadd.f32 %v671, %v695
        %s698 = sld [smem:[#allocation5 + $0xd]]
        %v699 = vstv %s698
        %v700 = vmul.f32 %v699, %v690
        %v701 = vmul.f32 %v699, %v691
        %v702 = vadd.f32 %v676, %v700
        %v703 = vadd.f32 %v677, %v701
        %s704 = sld [smem:[#allocation5 + $0xe]]
        %v705 = vstv %s704
        %v706 = vmul.f32 %v705, %v690
        %v707 = vmul.f32 %v705, %v691
        %v708 = vadd.f32 %v682, %v706
        %v709 = vadd.f32 %v683, %v707
        %s710 = sld [smem:[#allocation5 + $0xf]]
        %v711 = vstv %s710
        %v712 = vmul.f32 %v711, %v690
        %v713 = vmul.f32 %v711, %v691
        %v714 = vadd.f32 %v688, %v712
        %v715 = vadd.f32 %v689, %v713
        %v716 = vld [vmem:[#allocation2 + $0x2] sm:$0xff]
        %v717 = vld [vmem:[#allocation2 + $0xa] sm:$0xff]
        %s718 = sld [smem:[#allocation5 + $0x10]]
        %v719 = vstv %s718
        %v720 = vmul.f32 %v719, %v716
        %v721 = vmul.f32 %v719, %v717
        %v722 = vadd.f32 %v696, %v720
        %v723 = vadd.f32 %v697, %v721
        %s724 = sld [smem:[#allocation5 + $0x11]]
        %v725 = vstv %s724
        %v726 = vmul.f32 %v725, %v716
        %v727 = vmul.f32 %v725, %v717
        %v728 = vadd.f32 %v702, %v726
        %v729 = vadd.f32 %v703, %v727
        %s730 = sld [smem:[#allocation5 + $0x12]]
        %v731 = vstv %s730
        %v732 = vmul.f32 %v731, %v716
        %v733 = vmul.f32 %v731, %v717
        %v734 = vadd.f32 %v708, %v732
        %v735 = vadd.f32 %v709, %v733
        %s736 = sld [smem:[#allocation5 + $0x13]]
        %v737 = vstv %s736
        %v738 = vmul.f32 %v737, %v716
        %v739 = vmul.f32 %v737, %v717
        %v740 = vadd.f32 %v714, %v738
        %v741 = vadd.f32 %v715, %v739
        %v742 = vld [vmem:[#allocation2 + $0x14] sm:$0xff]
        %v743 = vld [vmem:[#allocation2 + $0x1c] sm:$0xff]
        %s744 = sld [smem:[#allocation5 + $0x14]]
        %v745 = vstv %s744
        %v746 = vmul.f32 %v745, %v742
        %v747 = vmul.f32 %v745, %v743
        %v748 = vadd.f32 %v722, %v746
        %v749 = vadd.f32 %v723, %v747
        %s750 = sld [smem:[#allocation5 + $0x15]]
        %v751 = vstv %s750
        %v752 = vmul.f32 %v751, %v742
        %v753 = vmul.f32 %v751, %v743
        %v754 = vadd.f32 %v728, %v752
        %v755 = vadd.f32 %v729, %v753
        %s756 = sld [smem:[#allocation5 + $0x16]]
        %v757 = vstv %s756
        %v758 = vmul.f32 %v757, %v742
        %v759 = vmul.f32 %v757, %v743
        %v760 = vadd.f32 %v734, %v758
        %v761 = vadd.f32 %v735, %v759
        %s762 = sld [smem:[#allocation5 + $0x17]]
        %v763 = vstv %s762
        %v764 = vmul.f32 %v763, %v742
        %v765 = vmul.f32 %v763, %v743
        %v766 = vadd.f32 %v740, %v764
        %v767 = vadd.f32 %v741, %v765
        %s768 = sld [smem:[#allocation7]]
        %v769 = vstv %s768
        %v770 = vadd.f32 %v748, %v769
        %v771 = vadd.f32 %v749, %v769
        %v772 = vmax.f32 %v770, 0.0
        %v773 = vmax.f32 %v771, 0.0
        %774 = vst [vmem:[#allocation3] sm:$0xff] %v772
        %775 = vst [vmem:[#allocation3 + $0x8] sm:$0xff] %v773
        %v776 = vld [vmem:[#allocation3] ss:$2 sm:$0xff]
        %s777 = scalar_lea.vmem [#allocation3], 1
        %v778 = vld [vmem:[%s777] ss:$2 sm:$0xff]
        %v779 = vmax.f32 %v776, %v778
        %s780 = sld [smem:[#allocation7 + $0x1]]
        %v781 = vstv %s780
        %v782 = vadd.f32 %v754, %v781
        %v783 = vadd.f32 %v755, %v781
        %v784 = vmax.f32 %v782, 0.0
        %v785 = vmax.f32 %v783, 0.0
        %786 = vst [vmem:[#allocation3] sm:$0xff] %v784
        %787 = vst [vmem:[#allocation3 + $0x8] sm:$0xff] %v785
        %v788 = vld [vmem:[#allocation3] ss:$2 sm:$0xff]
        %v789 = vld [vmem:[%s777] ss:$2 sm:$0xff]
        %v790 = vmax.f32 %v788, %v789
        %s791 = sld [smem:[#allocation7 + $0x2]]
        %v792 = vstv %s791
        %v793 = vadd.f32 %v760, %v792
        %v794 = vadd.f32 %v761, %v792
        %v795 = vmax.f32 %v793, 0.0
        %v796 = vmax.f32 %v794, 0.0
        %797 = vst [vmem:[#allocation3] sm:$0xff] %v795
        %798 = vst [vmem:[#allocation3 + $0x8] sm:$0xff] %v796
        %v799 = vld [vmem:[#allocation3] ss:$2 sm:$0xff]
        %v800 = vld [vmem:[%s777] ss:$2 sm:$0xff]
        %v801 = vmax.f32 %v799, %v800
        %s802 = sld [smem:[#allocation7 + $0x3]]
        %v803 = vstv %s802
        %v804 = vadd.f32 %v766, %v803
        %v805 = vadd.f32 %v767, %v803
        %v806 = vmax.f32 %v804, 0.0
        %v807 = vmax.f32 %v805, 0.0
        %808 = vst [vmem:[#allocation3] sm:$0xff] %v806
        %809 = vst [vmem:[#allocation3 + $0x8] sm:$0xff] %v807
        %v810 = vld [vmem:[#allocation3] ss:$2 sm:$0xff]
        %v811 = vld [vmem:[%s777] ss:$2 sm:$0xff]
        %v812 = vmax.f32 %v810, %v811
        %v813 = vrot.slane %v779, 4
        %v814 = vadd.f32 %v779, %v813
        %v815 = vrot.slane %v814, 2
        %v816 = vadd.f32 %v814, %v815
        %v817 = vrot.slane %v816, 1
        %v818 = vadd.f32 %v816, %v817
        %v819 = vmul.f32 %v779, %v779
        %v820 = vrot.slane %v819, 4
        %v821 = vadd.f32 %v819, %v820
        %v822 = vrot.slane %v821, 2
        %v823 = vadd.f32 %v821, %v822
        %v824 = vrot.slane %v823, 1
        %v825 = vadd.f32 %v823, %v824
        %v826 = vrot.slane %v790, 4
        %v827 = vadd.f32 %v790, %v826
        %v828 = vrot.slane %v827, 2
        %v829 = vadd.f32 %v827, %v828
        %v830 = vrot.slane %v829, 1
        %v831 = vadd.f32 %v829, %v830
        %v832 = vmul.f32 %v790, %v790
        %v833 = vrot.slane %v832, 4
        %v834 = vadd.f32 %v832, %v833
        %v835 = vrot.slane %v834, 2
        %v836 = vadd.f32 %v834, %v835
        %v837 = vrot.slane %v836, 1
        %v838 = vadd.f32 %v836, %v837
        %v839 = vadd.f32 %v818, %v831
        %v840 = vadd.f32 %v825, %v838
        %v841 = vrot.slane %v801, 4
        %v842 = vadd.f32 %v801, %v841
        %v843 = vrot.slane %v842, 2
        %v844 = vadd.f32 %v842, %v843
        %v845 = vrot.slane %v844, 1
        %v846 = vadd.f32 %v844, %v845
        %v847 = vmul.f32 %v801, %v801
        %v848 = vrot.slane %v847, 4
        %v849 = vadd.f32 %v847, %v848
        %v850 = vrot.slane %v849, 2
        %v851 = vadd.f32 %v849, %v850
        %v852 = vrot.slane %v851, 1
        %v853 = vadd.f32 %v851, %v852
        %v854 = vadd.f32 %v839, %v846
        %v855 = vadd.f32 %v840, %v853
        %v856 = vrot.slane %v812, 4
        %v857 = vadd.f32 %v812, %v856
        %v858 = vrot.slane %v857, 2
        %v859 = vadd.f32 %v857, %v858
        %v860 = vrot.slane %v859, 1
        %v861 = vadd.f32 %v859, %v860
        %v862 = vmul.f32 %v812, %v812
        %v863 = vrot.slane %v862, 4
        %v864 = vadd.f32 %v862, %v863
        %v865 = vrot.slane %v864, 2
        %v866 = vadd.f32 %v864, %v865
        %v867 = vrot.slane %v866, 1
        %v868 = vadd.f32 %v866, %v867
        %v869 = vadd.f32 %v854, %v861
        %v870 = vadd.f32 %v855, %v868
        %v871 = vmul.f32 %v869, 0.03125
        %v872 = vmul.f32 %v870, 0.03125
        %v873 = vmul.f32 %v871, %v871
        %v874 = vsub.f32 %v872, %v873
        %v875 = vmax.f32 %v874, 0.0
        %v876 = vadd.f32 %v875, 1e-05
        %v877 = vrsqrt.pop %v876
        %v878 = vld [vmem:[%s6] sm:$0xff]
        %v879 = vld [vmem:[%s7] sm:$0xff]
        %v880 = vsub.f32 %v779, %v871
        %v881 = vmul.f32 %v880, %v877
        %883 = vset.pattern.permute.xlu0 0
        %884 = vperm.xlu0 %883, %v878
        %v885 = vpop.permute.xlu0 %884
        %v887 = vmul.f32 %v881, %v885
        %889 = vset.pattern.permute.xlu0 0
        %890 = vperm.xlu0 %889, %v879
        %v891 = vpop.permute.xlu0 %890
        %v893 = vadd.f32 %v887, %v891
        %894 = vst [vmem:[#allocation2] sm:$0xff] %v893
        %v895 = vld [vmem:[%s6 + $0x8] sm:$0xff]
        %v896 = vld [vmem:[%s7 + $0x8] sm:$0xff]
        %v897 = vsub.f32 %v790, %v871
        %v898 = vmul.f32 %v897, %v877
        %900 = vset.pattern.permute.xlu0 0
        %901 = vperm.xlu0 %900, %v895
        %v902 = vpop.permute.xlu0 %901
        %v904 = vmul.f32 %v898, %v902
        %906 = vset.pattern.permute.xlu0 0
        %907 = vperm.xlu0 %906, %v896
        %v908 = vpop.permute.xlu0 %907
        %v910 = vadd.f32 %v904, %v908
        %911 = vst [vmem:[#allocation2 + $0x8] sm:$0xff] %v910
        %v912 = vld [vmem:[%s6 + $0x10] sm:$0xff]
        %v913 = vld [vmem:[%s7 + $0x10] sm:$0xff]
        %v914 = vsub.f32 %v801, %v871
        %v915 = vmul.f32 %v914, %v877
        %917 = vset.pattern.permute.xlu0 0
        %918 = vperm.xlu0 %917, %v912
        %v919 = vpop.permute.xlu0 %918
        %v921 = vmul.f32 %v915, %v919
        %923 = vset.pattern.permute.xlu0 0
        %924 = vperm.xlu0 %923, %v913
        %v925 = vpop.permute.xlu0 %924
        %v927 = vadd.f32 %v921, %v925
        %928 = vst [vmem:[#allocation2 + $0x10] sm:$0xff] %v927
        %v929 = vld [vmem:[%s6 + $0x18] sm:$0xff]
        %v930 = vld [vmem:[%s7 + $0x18] sm:$0xff]
        %v931 = vsub.f32 %v812, %v871
        %v932 = vmul.f32 %v931, %v877
        %934 = vset.pattern.permute.xlu0 0
        %935 = vperm.xlu0 %934, %v929
        %v936 = vpop.permute.xlu0 %935
        %v938 = vmul.f32 %v932, %v936
        %940 = vset.pattern.permute.xlu0 0
        %941 = vperm.xlu0 %940, %v930
        %v942 = vpop.permute.xlu0 %941
        %v944 = vadd.f32 %v938, %v942
        %945 = vst [vmem:[#allocation2 + $0x18] sm:$0xff] %v944
        %v946 = vld [vmem:[#allocation2] sm:$0x3f]
        %s947 = sld [smem:[#allocation9]]
        %v948 = vstv %s947
        %v949 = vmul.f32 %v948, %v946
        %v950 = vld [vmem:[#allocation2 + $0x8] sm:$0x3f]
        %s951 = sld [smem:[#allocation9 + $0x1]]
        %v952 = vstv %s951
        %v953 = vmul.f32 %v952, %v950
        %v954 = vadd.f32 %v949, %v953
        %v955 = vld [vmem:[#allocation2 + $0x10] sm:$0x3f]
        %s956 = sld [smem:[#allocation9 + $0x2]]
        %v957 = vstv %s956
        %v958 = vmul.f32 %v957, %v955
        %v959 = vadd.f32 %v954, %v958
        %v960 = vld [vmem:[#allocation2 + $0x18] sm:$0x3f]
        %s961 = sld [smem:[#allocation9 + $0x3]]
        %v962 = vstv %s961
        %v963 = vmul.f32 %v962, %v960
        %v964 = vadd.f32 %v959, %v963
        %v965 = vld [vmem:[#allocation2 + $0x1] sm:$0x3f]
        %s966 = sld [smem:[#allocation9 + $0x4]]
        %v967 = vstv %s966
        %v968 = vmul.f32 %v967, %v965
        %v969 = vadd.f32 %v964, %v968
        %v970 = vld [vmem:[#allocation2 + $0x9] sm:$0x3f]
        %s971 = sld [smem:[#allocation9 + $0x5]]
        %v972 = vstv %s971
        %v973 = vmul.f32 %v972, %v970
        %v974 = vadd.f32 %v969, %v973
        %v975 = vld [vmem:[#allocation2 + $0x11] sm:$0x3f]
        %s976 = sld [smem:[#allocation9 + $0x6]]
        %v977 = vstv %s976
        %v978 = vmul.f32 %v977, %v975
        %v979 = vadd.f32 %v974, %v978
        %v980 = vld [vmem:[#allocation2 + $0x19] sm:$0x3f]
        %s981 = sld [smem:[#allocation9 + $0x7]]
        %v982 = vstv %s981
        %v983 = vmul.f32 %v982, %v980
        %v984 = vadd.f32 %v979, %v983
        %v985 = vld [vmem:[#allocation2 + $0x2] sm:$0x3f]
        %s986 = sld [smem:[#allocation9 + $0x8]]
        %v987 = vstv %s986
        %v988 = vmul.f32 %v987, %v985
        %v989 = vadd.f32 %v984, %v988
        %v990 = vld [vmem:[#allocation2 + $0xa] sm:$0x3f]
        %s991 = sld [smem:[#allocation9 + $0x9]]
        %v992 = vstv %s991
        %v993 = vmul.f32 %v992, %v990
        %v994 = vadd.f32 %v989, %v993
        %v995 = vld [vmem:[#allocation2 + $0x12] sm:$0x3f]
        %s996 = sld [smem:[#allocation9 + $0xa]]
        %v997 = vstv %s996
        %v998 = vmul.f32 %v997, %v995
        %v999 = vadd.f32 %v994, %v998
        %v1000 = vld [vmem:[#allocation2 + $0x1a] sm:$0x3f]
        %s1001 = sld [smem:[#allocation9 + $0xb]]
        %v1002 = vstv %s1001
        %v1003 = vmul.f32 %v1002, %v1000
        %v1004 = vadd.f32 %v999, %v1003
        %s1005 = sld [smem:[#allocation4]]
        %v1006 = vstv %s1005
        %v1007 = vadd.f32 %v1004, %v1006
        %v1008 = vmax.f32 %v1007, 0.0
        %1009 = vst [vmem:[%s459] sm:$0x3f] %v1008
        %p1010 = scmp.lt.s32.totalorder %s28, 1
        %s1011 = scalar_select %p1010, %s28, 1
        %p1012 = scmp.lt.s32.totalorder %s29, 0
        %s1013 = scalar_select %p1012, %s29, 0
        %s1014 = sadd.s32 %s1013, %s1011
        %s1015 = smul.addr %s1014, 8
        %s1016 = scalar_lea.vmem %s10, %s1015
        // Predicated region
        $region73: #{tpu_custom_call.1} parent=59 // pred_check
          %p1017 = pneg %p280
        $region74: #{tpu_custom_call.1} parent=59 // pred_check_branch
          %1019 = sbr.rel (%p1017) target = $region76
        $region75: #{tpu_custom_call.1} parent=59 // pred_region
          _
        $region76: #{tpu_custom_call.1} parent=59 // pred_fallthru
          _
      $region60: #{tpu_custom_call.1} parent=5 // pred_fallthru
        _
      %p1020 = scmp.le.s32.totalorder 2, %s19
      // Predicated region
      $region77: #{tpu_custom_call.1} parent=5 // pred_check
        %p1021 = pneg %p1020
      $region78: #{tpu_custom_call.1} parent=5 // pred_check_branch
        %1023 = sbr.rel (%p1021) target = $region80
      $region79: #{tpu_custom_call.1} parent=5 // pred_region
        %s1024 = ssub.s32 %s19, 2
        // Predicated region
        $region81: #{tpu_custom_call.1} parent=79 // pred_check
          %p1025 = pneg %p286
        $region82: #{tpu_custom_call.1} parent=79 // pred_check_branch
          %1027 = sbr.rel (%p1025) target = $region84
        $region83: #{tpu_custom_call.1} parent=79 // pred_region
          %p1028 = scmp.lt.s32.totalorder %s30, 1
          %s1029 = scalar_select %p1028, %s30, 1
          %p1030 = scmp.lt.s32.totalorder %s31, 0
          %s1031 = scalar_select %p1030, %s31, 0
          %s1032 = sadd.s32 %s1031, %s1029
          %s1033 = smul.addr %s1032, 8
          %s1034 = scalar_lea.vmem %s10, %s1033
        $region84: #{tpu_custom_call.1} parent=79 // pred_fallthru
          _
      $region80: #{tpu_custom_call.1} parent=5 // pred_fallthru
        _
    $region6: #{tpu_custom_call.1} parent=1 // loop_footer
      %s23 = sadd.s32 1, %s19
    $region7: #{tpu_custom_call.1} parent=1 // loop_footer_branch
      %18 = sbr.rel target = $region3
    $region8: #{tpu_custom_call.1} parent=1 // loop_exit
      _
    %1035 = vsyncpa [#allocation6], 1
    %s1036 = scalar_lea.sflag [#allocation6], 1
    %1037 = vsyncpa %s1036, 1
    %1038 = vsyncpa [#allocation8], 1

</llo_original>
